<compile_context>
chip_gen: v6e
topology: v6e:2x2x1
jax: 0.10.0
libtpu: 0.0.40
codegen_flags: <defaults>
</compile_context>

<pallas_src>
import functools

import jax
import jax.numpy as jnp
import numpy as np
from jax.experimental import pallas as pl
from jax.experimental.pallas import tpu as pltpu


# ---------------- Pallas kernels ----------------

def _down_proj_pool_kernel(x_ref, pwt_ref, ph_ref, w_ref, b_ref,
                           th_ref, phi_ref, g_ref, *, c, ch, h, w):
    """Fused: depthwise 4x4/4 'down' conv + theta|phi|g 1x1 convs + 2x2 max pool."""
    h4, w4 = h // 4, w // 4
    h2, w2 = h4 // 2, w4 // 2
    L = h4 * w4

    x3 = x_ref[0]                                                    # (c, h, w)
    # separable 4x4 avg pool (== depthwise conv with constant 1/16 weights):
    # width contraction as ONE (c*h, w) @ (w, w4) matmul (channels folded into M)
    t = jnp.dot(x3.reshape(c * h, w), pwt_ref[...],
                preferred_element_type=jnp.float32)                  # (c*h, w4)
    # height contraction, batched over channels on the MXU
    ph_b = jnp.broadcast_to(ph_ref[...], (c, h4, h))
    xd = jax.lax.dot_general(ph_b, t.reshape(c, h, w4),
                             (((2,), (1,)), ((0,), (0,))),
                             preferred_element_type=jnp.float32)     # (c, h4, w4)

    # fused theta|phi|g projection, channels-first: (3ch, L)
    proj = jax.lax.dot_general(w_ref[...], xd.reshape(c, L),
                               (((0,), (0,)), ((), ())),
                               preferred_element_type=jnp.float32)
    proj = proj + b_ref[...]                                         # b: (3ch, 1)

    def pool_tok(t_cf):  # (ch, L) -> (Lp, ch): 2x2/stride-2 max pool, token layout
        tt = t_cf.T.reshape(h4, w4, ch)
        tt = jnp.max(tt.reshape(h2, 2, w4, ch), axis=1)              # (h2, w4, ch)
        tt = jnp.max(tt.reshape(h2, w2, 2, ch), axis=2)              # (h2, w2, ch)
        return tt.reshape(h2 * w2, ch)

    th_ref[0] = proj[0:ch].astype(th_ref.dtype)                      # (ch, L)
    phi_ref[0] = pool_tok(proj[ch:2 * ch]).astype(phi_ref.dtype)     # (Lp, ch)
    g_ref[0] = pool_tok(proj[2 * ch:3 * ch]).astype(g_ref.dtype)     # (Lp, ch)


def _attn_z_kernel(th_ref, phi_ref, g_ref, wz_ref, bz_ref, o_ref):
    """softmax(theta^T phi) @ g fused with the z 1x1 conv; one L-tile per step."""
    th = th_ref[0]                                                   # (ch, TL) bf16
    ph = phi_ref[0]                                                  # (Lp, ch) bf16
    g = g_ref[0]                                                     # (Lp, ch) bf16
    s = jax.lax.dot_general(th, ph, (((0,), (1,)), ((), ())),
                            preferred_element_type=jnp.float32)      # (TL, Lp)
    s = s - jnp.max(s, axis=-1, keepdims=True)
    p = jnp.exp(s)
    f = p * pl.reciprocal(jnp.sum(p, axis=-1, keepdims=True), approx=True)
    y = jnp.dot(f.astype(jnp.bfloat16), g,
                preferred_element_type=jnp.float32)                  # (TL, ch)
    zy = jax.lax.dot_general(wz_ref[...], y, (((0,), (1,)), ((), ())),
                             preferred_element_type=jnp.float32)     # (c, TL)
    o_ref[0] = zy + bz_ref[...]                                      # bz: (c, 1)


def _up_res_kernel(x_ref, zy_ref, ah_ref, awt_ref, o_ref, *, c, th_rows, h4, w4, w):
    """Bilinear x4 (align_corners=True) upsample of z(y) + residual, one row tile."""
    zy = zy_ref[0]                                                   # (c, h4, w4)
    tw = jnp.dot(zy.reshape(c * h4, w4), awt_ref[...],
                 preferred_element_type=jnp.float32)                 # (c*h4, w)
    ah_b = jnp.broadcast_to(ah_ref[...], (c, th_rows, h4))
    up = jax.lax.dot_general(ah_b, tw.reshape(c, h4, w),
                             (((2,), (1,)), ((0,), (0,))),
                             preferred_element_type=jnp.float32)     # (c, TH, w)
    o_ref[0] = x_ref[0] + up


# ---------------- helpers (glue) ----------------

def _avgpool_mats(h, w, k=4):
    h4, w4 = h // k, w // k
    ph = np.zeros((h4, h), np.float32)
    for i in range(h4):
        ph[i, i * k:(i + 1) * k] = 1.0 / k
    pwt = np.zeros((w, w4), np.float32)
    for j in range(w4):
        pwt[j * k:(j + 1) * k, j] = 1.0 / k
    return jnp.asarray(ph), jnp.asarray(pwt)


def _bilinear_mat(out_size, in_size):
    a = np.zeros((out_size, in_size), np.float32)
    if in_size == 1:
        a[:, 0] = 1.0
        return jnp.asarray(a)
    scale = (in_size - 1) / (out_size - 1)
    for i in range(out_size):
        src = i * scale
        i0 = min(int(np.floor(src)), in_size - 2)
        frac = src - i0
        a[i, i0] += 1.0 - frac
        a[i, i0 + 1] += frac
    return jnp.asarray(a)


def _pick_tile(size, quantum, max_tile):
    """Largest proper divisor of `size` that is a multiple of `quantum` and
    <= max_tile; falls back to `size` (single tile) if none exists."""
    best = size
    t = quantum
    limit = min(size - 1, max_tile)
    while t <= limit:
        if size % t == 0:
            best = t
        t += quantum
    return best


# ---------------- forward ----------------

def _nlb_forward(x, params):
    n, c, h, w = x.shape
    ch = c // 2
    h4, w4 = h // 4, w // 4
    h2, w2 = h4 // 2, w4 // 2
    L, Lp = h4 * w4, h2 * w2
    TL = _pick_tile(L, 128, 1024)   # attention query tile (lane axis of its output)
    TH = _pick_tile(h, 8, 128)      # output-row tile for the upsample/residual

    ph_mat, pwt_mat = _avgpool_mats(h, w, 4)            # (h4, h), (w, w4)
    ah = _bilinear_mat(h, h4)                           # (h, h4)
    awt = jnp.transpose(_bilinear_mat(w, w4))           # (w4, w)

    # fused theta|phi|g weights; channels-first bias columns
    w_tpg = jnp.concatenate(
        [params["w_theta"], params["w_phi"], params["w_g"]], axis=1)            # (c, 3ch)
    b_tpg = jnp.transpose(jnp.concatenate(
        [params["b_theta"], params["b_phi"], params["b_g"]], axis=1))           # (3ch, 1)
    b_z = jnp.transpose(params["b_z"])                                          # (c, 1)

    vmem = 64 * 1024 * 1024  # sized for v7x 64 MiB physical VMEM (fine on v5e/v6e)

    # --- kernel 1: down conv + fused theta/phi/g projection + 2x2 max pool ---
    theta, phi_p, g_p = pl.pallas_call(
        functools.partial(_down_proj_pool_kernel, c=c, ch=ch, h=h, w=w),
        grid=(n,),
        in_specs=[
            pl.BlockSpec((1, c, h, w), lambda b: (b, 0, 0, 0)),
            pl.BlockSpec((w, w4), lambda b: (0, 0)),
            pl.BlockSpec((h4, h), lambda b: (0, 0)),
            pl.BlockSpec((c, 3 * ch), lambda b: (0, 0)),
            pl.BlockSpec((3 * ch, 1), lambda b: (0, 0)),
        ],
        out_specs=[
            pl.BlockSpec((1, ch, L), lambda b: (b, 0, 0)),
            pl.BlockSpec((1, Lp, ch), lambda b: (b, 0, 0)),
            pl.BlockSpec((1, Lp, ch), lambda b: (b, 0, 0)),
        ],
        out_shape=[
            jax.ShapeDtypeStruct((n, ch, L), jnp.bfloat16),
            jax.ShapeDtypeStruct((n, Lp, ch), jnp.bfloat16),
            jax.ShapeDtypeStruct((n, Lp, ch), jnp.bfloat16),
        ],
        compiler_params=pltpu.CompilerParams(
            dimension_semantics=("parallel",), vmem_limit_bytes=vmem),
    )(x, pwt_mat, ph_mat, w_tpg, b_tpg)

    # --- kernel 2: attention + z 1x1 conv, tiled over L; lane-dense (c, TL) output ---
    zy_cf = pl.pallas_call(
        _attn_z_kernel,
        grid=(n, L // TL),
        in_specs=[
            pl.BlockSpec((1, ch, TL), lambda b, lt: (b, 0, lt)),
            pl.BlockSpec((1, Lp, ch), lambda b, lt: (b, 0, 0)),
            pl.BlockSpec((1, Lp, ch), lambda b, lt: (b, 0, 0)),
            pl.BlockSpec((ch, c), lambda b, lt: (0, 0)),
            pl.BlockSpec((c, 1), lambda b, lt: (0, 0)),
        ],
        out_specs=pl.BlockSpec((1, c, TL), lambda b, lt: (b, 0, lt)),
        out_shape=jax.ShapeDtypeStruct((n, c, L), jnp.float32),
        compiler_params=pltpu.CompilerParams(
            dimension_semantics=("parallel", "parallel"), vmem_limit_bytes=vmem),
    )(theta, phi_p, g_p, params["w_z"], b_z)

    zy_img = zy_cf.reshape(n, c, h4, w4)   # pure (free) reshape, no transpose

    # --- kernel 3: bilinear x4 upsample + residual, tiled over output rows;
    #     x aliased to the output buffer ---
    out = pl.pallas_call(
        functools.partial(_up_res_kernel, c=c, th_rows=TH, h4=h4, w4=w4, w=w),
        grid=(n, h // TH),
        in_specs=[
            pl.BlockSpec((1, c, TH, w), lambda b, r: (b, 0, r, 0)),
            pl.BlockSpec((1, c, h4, w4), lambda b, r: (b, 0, 0, 0)),
            pl.BlockSpec((TH, h4), lambda b, r: (r, 0)),
            pl.BlockSpec((w4, w), lambda b, r: (0, 0)),
        ],
        out_specs=pl.BlockSpec((1, c, TH, w), lambda b, r: (b, 0, r, 0)),
        out_shape=jax.ShapeDtypeStruct((n, c, h, w), jnp.float32),
        input_output_aliases={0: 0},
        compiler_params=pltpu.CompilerParams(
            dimension_semantics=("parallel", "parallel"), vmem_limit_bytes=vmem),
    )(x, zy_img, ah, awt)
    return out


nlb_forward = jax.jit(_nlb_forward)


# ---------------- pure-JAX reference (for verification) ----------------

def nlb_reference(x, params):
    n, c, h, w = x.shape
    ch = c // 2
    h4, w4 = h // 4, w // 4
    xd_img = x.reshape(n, c, h4, 4, w4, 4).mean(axis=(3, 5))     # down conv (1/16 avg)
    xd = xd_img.reshape(n, c, h4 * w4).transpose(0, 2, 1)
    theta = xd @ params["w_theta"] + params["b_theta"]
    phi = xd @ params["w_phi"] + params["b_phi"]
    g = xd @ params["w_g"] + params["b_g"]

    def pool(t):
        return t.reshape(n, h4 // 2, 2, w4 // 2, 2, ch).max(axis=(2, 4)).reshape(n, -1, ch)

    phi_p, g_p = pool(phi), pool(g)
    s = jnp.einsum('nlc,npc->nlp', theta, phi_p)
    f = jax.nn.softmax(s, axis=-1)
    y = jnp.einsum('nlp,npc->nlc', f, g_p)
    zy = y @ params["w_z"] + params["b_z"]
    zy_img = zy.transpose(0, 2, 1).reshape(n, c, h4, w4)
    ah = _bilinear_mat(h, h4)
    aw = _bilinear_mat(w, w4)
    up = jnp.einsum('ik,nckl,jl->ncij', ah, zy_img, aw)
    return x + up


if __name__ == "__main__":
    n, c, h, w = 2, 4, 16, 16
    ch = c // 2
    key = jax.random.PRNGKey(0)
    ks = jax.random.split(key, 9)
    params = {
        "w_theta": 0.1 * jax.random.normal(ks[0], (c, ch), jnp.float32),
        "b_theta": 0.1 * jax.random.normal(ks[1], (1, ch), jnp.float32),
        "w_phi":   0.1 * jax.random.normal(ks[2], (c, ch), jnp.float32),
        "b_phi":   0.1 * jax.random.normal(ks[3], (1, ch), jnp.float32),
        "w_g":     0.1 * jax.random.normal(ks[4], (c, ch), jnp.float32),
        "b_g":     0.1 * jax.random.normal(ks[5], (1, ch), jnp.float32),
        "w_z":     0.1 * jax.random.normal(ks[6], (ch, c), jnp.float32),
        "b_z":     0.1 * jax.random.normal(ks[7], (1, c), jnp.float32),
    }
    x = jax.random.normal(ks[8], (n, c, h, w), jnp.float32)

    ref = jax.block_until_ready(nlb_reference(x, params))
    out = jax.block_until_ready(nlb_forward(x, params))
    assert out.shape == (n, c, h, w)
    err = float(np.max(np.abs(np.asarray(out) - np.asarray(ref))))
    if not np.allclose(np.asarray(out), np.asarray(ref), rtol=1e-2, atol=1e-2):
        raise AssertionError(f"mismatch vs reference, max abs diff = {err}")
    print("KERNEL_OK")
</pallas_src>

<mosaic_0001>
module attributes {stable_mosaic.version = 11 : i64} {
  func.func @_up_res_kernel(%arg0: i32, %arg1: i32, %arg2: memref<1x4x8x16xf32, #tpu.memory_space<vmem>>, %arg3: memref<1x4x4x4xf32, #tpu.memory_space<vmem>>, %arg4: memref<8x4xf32, #tpu.memory_space<vmem>>, %arg5: memref<4x16xf32, #tpu.memory_space<vmem>>, %arg6: memref<1x4x8x16xf32, #tpu.memory_space<vmem>>) attributes {dimension_semantics = [#tpu.dimension_semantics<parallel>, #tpu.dimension_semantics<parallel>], iteration_bounds = array<i64: 2, 2>, scalar_prefetch = 0 : i64, scratch_operands = 0 : i64, tpu.core_type = #tpu.core_type<tc>, window_params = [{transform_indices = @transform_0, window_bounds = array<i64: 1, 4, 8, 16>}, {transform_indices = @transform_1, window_bounds = array<i64: 1, 4, 4, 4>}, {transform_indices = @transform_2, window_bounds = array<i64: 8, 4>}, {pipeline_mode = #tpu.pipeline_mode<synchronous>, transform_indices = @transform_3, window_bounds = array<i64: 4, 16>}, {transform_indices = @transform_4, window_bounds = array<i64: 1, 4, 8, 16>}]} {
    %c0 = arith.constant 0 : index
    %c0_0 = arith.constant 0 : index
    %c0_1 = arith.constant 0 : index
    %c0_2 = arith.constant 0 : index
    %0 = vector.load %arg3[%c0, %c0_0, %c0_1, %c0_2] : memref<1x4x4x4xf32, #tpu.memory_space<vmem>>, vector<1x4x4x4xf32>
    %1 = vector.shape_cast %0 : vector<1x4x4x4xf32> to vector<4x4x4xf32>
    %2 = vector.shape_cast %1 : vector<4x4x4xf32> to vector<16x4xf32>
    %c0_3 = arith.constant 0 : index
    %c0_4 = arith.constant 0 : index
    %3 = vector.load %arg5[%c0_3, %c0_4] : memref<4x16xf32, #tpu.memory_space<vmem>>, vector<4x16xf32>
    %cst = arith.constant dense<0.000000e+00> : vector<16x16xf32>
    %4 = tpu.matmul %2, %3, %cst {dimension_numbers = #tpu.dot_dimension_numbers<[1], [0], [0], [1], [0, 0, 1, 1], [], []>} : vector<16x4xf32>, vector<4x16xf32>, vector<16x16xf32> -> vector<16x16xf32>
    %c0_5 = arith.constant 0 : index
    %c0_6 = arith.constant 0 : index
    %5 = vector.load %arg4[%c0_5, %c0_6] : memref<8x4xf32, #tpu.memory_space<vmem>>, vector<8x4xf32>
    %6 = vector.shape_cast %5 : vector<8x4xf32> to vector<1x8x4xf32>
    %7 = vector.broadcast %6 : vector<1x8x4xf32> to vector<4x8x4xf32>
    %8 = vector.shape_cast %4 : vector<16x16xf32> to vector<4x4x16xf32>
    %cst_7 = arith.constant dense<0.000000e+00> : vector<4x8x16xf32>
    %9 = tpu.matmul %7, %8, %cst_7 {dimension_numbers = #tpu.dot_dimension_numbers<[2], [1], [1], [2], [0, 0, 0, 1, 1, 2], [0], [0]>} : vector<4x8x4xf32>, vector<4x4x16xf32>, vector<4x8x16xf32> -> vector<4x8x16xf32>
    %c0_8 = arith.constant 0 : index
    %c0_9 = arith.constant 0 : index
    %c0_10 = arith.constant 0 : index
    %c0_11 = arith.constant 0 : index
    %10 = vector.load %arg2[%c0_8, %c0_9, %c0_10, %c0_11] : memref<1x4x8x16xf32, #tpu.memory_space<vmem>>, vector<1x4x8x16xf32>
    %11 = vector.shape_cast %10 : vector<1x4x8x16xf32> to vector<4x8x16xf32>
    %12 = arith.addf %11, %9 : vector<4x8x16xf32>
    %c0_12 = arith.constant 0 : index
    %c0_13 = arith.constant 0 : index
    %c0_14 = arith.constant 0 : index
    %c0_15 = arith.constant 0 : index
    %13 = vector.load %arg6[%c0_12, %c0_13, %c0_14, %c0_15] : memref<1x4x8x16xf32, #tpu.memory_space<vmem>>, vector<1x4x8x16xf32>
    %14 = vector.shape_cast %13 : vector<1x4x8x16xf32> to vector<4x8x16xf32>
    %15 = vector.shape_cast %12 : vector<4x8x16xf32> to vector<1x4x8x16xf32>
    tpu.vector_store %arg6[%c0_12, %c0_13, %c0_14, %c0_15], %15 {strides = array<i32>} : memref<1x4x8x16xf32, #tpu.memory_space<vmem>>, vector<1x4x8x16xf32>,
    return
  }
  func.func @transform_0(%arg0: i32, %arg1: i32) -> (i32, i32, i32, i32) {
    %c0_i32 = arith.constant 0 : i32
    %c0_i32_0 = arith.constant 0 : i32
    %c0_i32_1 = arith.constant 0 : i32
    return %arg0, %c0_i32, %arg1, %c0_i32_0 : i32, i32, i32, i32
  }
  func.func @transform_1(%arg0: i32, %arg1: i32) -> (i32, i32, i32, i32) {
    %c0_i32 = arith.constant 0 : i32
    %c0_i32_0 = arith.constant 0 : i32
    %c0_i32_1 = arith.constant 0 : i32
    %c0_i32_2 = arith.constant 0 : i32
    return %arg0, %c0_i32, %c0_i32_0, %c0_i32_1 : i32, i32, i32, i32
  }
  func.func @transform_2(%arg0: i32, %arg1: i32) -> (i32, i32) {
    %c0_i32 = arith.constant 0 : i32
    %c0_i32_0 = arith.constant 0 : i32
    return %arg1, %c0_i32 : i32, i32
  }
  func.func @transform_3(%arg0: i32, %arg1: i32) -> (i32, i32) {
    %c0_i32 = arith.constant 0 : i32
    %c0_i32_0 = arith.constant 0 : i32
    %c0_i32_1 = arith.constant 0 : i32
    return %c0_i32, %c0_i32_0 : i32, i32
  }
  func.func @transform_4(%arg0: i32, %arg1: i32) -> (i32, i32, i32, i32) {
    %c0_i32 = arith.constant 0 : i32
    %c0_i32_0 = arith.constant 0 : i32
    %c0_i32_1 = arith.constant 0 : i32
    return %arg0, %c0_i32, %arg1, %c0_i32_0 : i32, i32, i32, i32
  }
}

module attributes {stable_mosaic.version = 11 : i64} {
  func.func @_down_proj_pool_kernel(%arg0: i32, %arg1: memref<1x4x16x16xf32, #tpu.memory_space<vmem>>, %arg2: memref<16x4xf32, #tpu.memory_space<vmem>>, %arg3: memref<4x16xf32, #tpu.memory_space<vmem>>, %arg4: memref<4x6xf32, #tpu.memory_space<vmem>>, %arg5: memref<6x1xf32, #tpu.memory_space<vmem>>, %arg6: memref<1x2x16xbf16, #tpu.memory_space<vmem>>, %arg7: memref<1x4x2xbf16, #tpu.memory_space<vmem>>, %arg8: memref<1x4x2xbf16, #tpu.memory_space<vmem>>) attributes {dimension_semantics = [#tpu.dimension_semantics<parallel>], iteration_bounds = array<i64: 2>, scalar_prefetch = 0 : i64, scratch_operands = 0 : i64, tpu.core_type = #tpu.core_type<tc>, window_params = [{transform_indices = @transform_0, window_bounds = array<i64: 1, 4, 16, 16>}, {pipeline_mode = #tpu.pipeline_mode<synchronous>, transform_indices = @transform_1, window_bounds = array<i64: 16, 4>}, {pipeline_mode = #tpu.pipeline_mode<synchronous>, transform_indices = @transform_2, window_bounds = array<i64: 4, 16>}, {pipeline_mode = #tpu.pipeline_mode<synchronous>, transform_indices = @transform_3, window_bounds = array<i64: 4, 6>}, {pipeline_mode = #tpu.pipeline_mode<synchronous>, transform_indices = @transform_4, window_bounds = array<i64: 6, 1>}, {transform_indices = @transform_5, window_bounds = array<i64: 1, 2, 16>}, {transform_indices = @transform_6, window_bounds = array<i64: 1, 4, 2>}, {transform_indices = @transform_7, window_bounds = array<i64: 1, 4, 2>}]} {
    %c0 = arith.constant 0 : index
    %c0_0 = arith.constant 0 : index
    %c0_1 = arith.constant 0 : index
    %c0_2 = arith.constant 0 : index
    %0 = vector.load %arg1[%c0, %c0_0, %c0_1, %c0_2] : memref<1x4x16x16xf32, #tpu.memory_space<vmem>>, vector<1x4x16x16xf32>
    %1 = vector.shape_cast %0 : vector<1x4x16x16xf32> to vector<4x16x16xf32>
    %2 = vector.shape_cast %1 : vector<4x16x16xf32> to vector<64x16xf32>
    %c0_3 = arith.constant 0 : index
    %c0_4 = arith.constant 0 : index
    %3 = vector.load %arg2[%c0_3, %c0_4] : memref<16x4xf32, #tpu.memory_space<vmem>>, vector<16x4xf32>
    %cst = arith.constant dense<0.000000e+00> : vector<64x4xf32>
    %4 = tpu.matmul %2, %3, %cst {dimension_numbers = #tpu.dot_dimension_numbers<[1], [0], [0], [1], [0, 0, 1, 1], [], []>} : vector<64x16xf32>, vector<16x4xf32>, vector<64x4xf32> -> vector<64x4xf32>
    %c0_5 = arith.constant 0 : index
    %c0_6 = arith.constant 0 : index
    %5 = vector.load %arg3[%c0_5, %c0_6] : memref<4x16xf32, #tpu.memory_space<vmem>>, vector<4x16xf32>
    %6 = vector.shape_cast %5 : vector<4x16xf32> to vector<1x4x16xf32>
    %7 = vector.broadcast %6 : vector<1x4x16xf32> to vector<4x4x16xf32>
    %8 = vector.shape_cast %4 : vector<64x4xf32> to vector<4x16x4xf32>
    %cst_7 = arith.constant dense<0.000000e+00> : vector<4x4x4xf32>
    %9 = tpu.matmul %7, %8, %cst_7 {dimension_numbers = #tpu.dot_dimension_numbers<[2], [1], [1], [2], [0, 0, 0, 1, 1, 2], [0], [0]>} : vector<4x4x16xf32>, vector<4x16x4xf32>, vector<4x4x4xf32> -> vector<4x4x4xf32>
    %c0_8 = arith.constant 0 : index
    %c0_9 = arith.constant 0 : index
    %10 = vector.load %arg4[%c0_8, %c0_9] : memref<4x6xf32, #tpu.memory_space<vmem>>, vector<4x6xf32>
    %11 = vector.shape_cast %9 : vector<4x4x4xf32> to vector<4x16xf32>
    %cst_10 = arith.constant dense<0.000000e+00> : vector<6x16xf32>
    %12 = tpu.matmul %10, %11, %cst_10 {dimension_numbers = #tpu.dot_dimension_numbers<[0], [0], [1], [1], [0, 1, 1, 1], [], []>} : vector<4x6xf32>, vector<4x16xf32>, vector<6x16xf32> -> vector<6x16xf32>
    %c0_11 = arith.constant 0 : index
    %c0_12 = arith.constant 0 : index
    %13 = vector.load %arg5[%c0_11, %c0_12] : memref<6x1xf32, #tpu.memory_space<vmem>>, vector<6x1xf32>
    %14 = vector.broadcast %13 : vector<6x1xf32> to vector<6x16xf32>
    %15 = arith.addf %12, %14 : vector<6x16xf32>
    %16 = vector.extract_strided_slice %15 {offsets = [0, 0], sizes = [2, 16], strides = [1, 1]} : vector<6x16xf32> to vector<2x16xf32>
    %17 = arith.truncf %16 : vector<2x16xf32> to vector<2x16xbf16>
    %c0_13 = arith.constant 0 : index
    %c0_14 = arith.constant 0 : index
    %c0_15 = arith.constant 0 : index
    %18 = vector.load %arg6[%c0_13, %c0_14, %c0_15] : memref<1x2x16xbf16, #tpu.memory_space<vmem>>, vector<1x2x16xbf16>
    %19 = vector.shape_cast %18 : vector<1x2x16xbf16> to vector<2x16xbf16>
    %20 = vector.shape_cast %17 : vector<2x16xbf16> to vector<1x2x16xbf16>
    tpu.vector_store %arg6[%c0_13, %c0_14, %c0_15], %20 {strides = array<i32>} : memref<1x2x16xbf16, #tpu.memory_space<vmem>>, vector<1x2x16xbf16>,
    %21 = vector.extract_strided_slice %15 {offsets = [2, 0], sizes = [2, 16], strides = [1, 1]} : vector<6x16xf32> to vector<2x16xf32>
    %22 = tpu.transpose %21, [1, 0] : vector<2x16xf32> -> vector<16x2xf32>
    %23 = vector.shape_cast %22 : vector<16x2xf32> to vector<4x4x2xf32>
    %24 = vector.shape_cast %23 : vector<4x4x2xf32> to vector<2x2x4x2xf32>
    %cst_16 = arith.constant dense<0xFF800000> : vector<2x4x2xf32>
    %25 = vector.multi_reduction <maximumf>, %24, %cst_16 [1] : vector<2x2x4x2xf32> to vector<2x4x2xf32>
    %26 = vector.shape_cast %25 : vector<2x4x2xf32> to vector<2x2x2x2xf32>
    %cst_17 = arith.constant dense<0xFF800000> : vector<2x2x2xf32>
    %27 = vector.multi_reduction <maximumf>, %26, %cst_17 [2] : vector<2x2x2x2xf32> to vector<2x2x2xf32>
    %28 = vector.shape_cast %27 : vector<2x2x2xf32> to vector<4x2xf32>
    %29 = arith.truncf %28 : vector<4x2xf32> to vector<4x2xbf16>
    %c0_18 = arith.constant 0 : index
    %c0_19 = arith.constant 0 : index
    %c0_20 = arith.constant 0 : index
    %30 = vector.load %arg7[%c0_18, %c0_19, %c0_20] : memref<1x4x2xbf16, #tpu.memory_space<vmem>>, vector<1x4x2xbf16>
    %31 = vector.shape_cast %30 : vector<1x4x2xbf16> to vector<4x2xbf16>
    %32 = vector.shape_cast %29 : vector<4x2xbf16> to vector<1x4x2xbf16>
    tpu.vector_store %arg7[%c0_18, %c0_19, %c0_20], %32 {strides = array<i32>} : memref<1x4x2xbf16, #tpu.memory_space<vmem>>, vector<1x4x2xbf16>,
    %33 = vector.extract_strided_slice %15 {offsets = [4, 0], sizes = [2, 16], strides = [1, 1]} : vector<6x16xf32> to vector<2x16xf32>
    %34 = tpu.transpose %33, [1, 0] : vector<2x16xf32> -> vector<16x2xf32>
    %35 = vector.shape_cast %34 : vector<16x2xf32> to vector<4x4x2xf32>
    %36 = vector.shape_cast %35 : vector<4x4x2xf32> to vector<2x2x4x2xf32>
    %cst_21 = arith.constant dense<0xFF800000> : vector<2x4x2xf32>
    %37 = vector.multi_reduction <maximumf>, %36, %cst_21 [1] : vector<2x2x4x2xf32> to vector<2x4x2xf32>
    %38 = vector.shape_cast %37 : vector<2x4x2xf32> to vector<2x2x2x2xf32>
    %cst_22 = arith.constant dense<0xFF800000> : vector<2x2x2xf32>
    %39 = vector.multi_reduction <maximumf>, %38, %cst_22 [2] : vector<2x2x2x2xf32> to vector<2x2x2xf32>
    %40 = vector.shape_cast %39 : vector<2x2x2xf32> to vector<4x2xf32>
    %41 = arith.truncf %40 : vector<4x2xf32> to vector<4x2xbf16>
    %c0_23 = arith.constant 0 : index
    %c0_24 = arith.constant 0 : index
    %c0_25 = arith.constant 0 : index
    %42 = vector.load %arg8[%c0_23, %c0_24, %c0_25] : memref<1x4x2xbf16, #tpu.memory_space<vmem>>, vector<1x4x2xbf16>
    %43 = vector.shape_cast %42 : vector<1x4x2xbf16> to vector<4x2xbf16>
    %44 = vector.shape_cast %41 : vector<4x2xbf16> to vector<1x4x2xbf16>
    tpu.vector_store %arg8[%c0_23, %c0_24, %c0_25], %44 {strides = array<i32>} : memref<1x4x2xbf16, #tpu.memory_space<vmem>>, vector<1x4x2xbf16>,
    return
  }
  func.func @transform_0(%arg0: i32) -> (i32, i32, i32, i32) {
    %c0_i32 = arith.constant 0 : i32
    %c0_i32_0 = arith.constant 0 : i32
    %c0_i32_1 = arith.constant 0 : i32
    %c0_i32_2 = arith.constant 0 : i32
    return %arg0, %c0_i32, %c0_i32_0, %c0_i32_1 : i32, i32, i32, i32
  }
  func.func @transform_1(%arg0: i32) -> (i32, i32) {
    %c0_i32 = arith.constant 0 : i32
    %c0_i32_0 = arith.constant 0 : i32
    %c0_i32_1 = arith.constant 0 : i32
    return %c0_i32, %c0_i32_0 : i32, i32
  }
  func.func @transform_2(%arg0: i32) -> (i32, i32) {
    %c0_i32 = arith.constant 0 : i32
    %c0_i32_0 = arith.constant 0 : i32
    %c0_i32_1 = arith.constant 0 : i32
    return %c0_i32, %c0_i32_0 : i32, i32
  }
  func.func @transform_3(%arg0: i32) -> (i32, i32) {
    %c0_i32 = arith.constant 0 : i32
    %c0_i32_0 = arith.constant 0 : i32
    %c0_i32_1 = arith.constant 0 : i32
    return %c0_i32, %c0_i32_0 : i32, i32
  }
  func.func @transform_4(%arg0: i32) -> (i32, i32) {
    %c0_i32 = arith.constant 0 : i32
    %c0_i32_0 = arith.constant 0 : i32
    %c0_i32_1 = arith.constant 0 : i32
    return %c0_i32, %c0_i32_0 : i32, i32
  }
  func.func @transform_5(%arg0: i32) -> (i32, i32, i32) {
    %c0_i32 = arith.constant 0 : i32
    %c0_i32_0 = arith.constant 0 : i32
    %c0_i32_1 = arith.constant 0 : i32
    return %arg0, %c0_i32, %c0_i32_0 : i32, i32, i32
  }
  func.func @transform_6(%arg0: i32) -> (i32, i32, i32) {
    %c0_i32 = arith.constant 0 : i32
    %c0_i32_0 = arith.constant 0 : i32
    %c0_i32_1 = arith.constant 0 : i32
    return %arg0, %c0_i32, %c0_i32_0 : i32, i32, i32
  }
  func.func @transform_7(%arg0: i32) -> (i32, i32, i32) {
    %c0_i32 = arith.constant 0 : i32
    %c0_i32_0 = arith.constant 0 : i32
    %c0_i32_1 = arith.constant 0 : i32
    return %arg0, %c0_i32, %c0_i32_0 : i32, i32, i32
  }
}

module attributes {stable_mosaic.version = 11 : i64} {
  func.func @_attn_z_kernel(%arg0: i32, %arg1: i32, %arg2: memref<1x2x16xbf16, #tpu.memory_space<vmem>>, %arg3: memref<1x4x2xbf16, #tpu.memory_space<vmem>>, %arg4: memref<1x4x2xbf16, #tpu.memory_space<vmem>>, %arg5: memref<2x4xf32, #tpu.memory_space<vmem>>, %arg6: memref<4x1xf32, #tpu.memory_space<vmem>>, %arg7: memref<1x4x16xf32, #tpu.memory_space<vmem>>) attributes {dimension_semantics = [#tpu.dimension_semantics<parallel>, #tpu.dimension_semantics<parallel>], iteration_bounds = array<i64: 2, 1>, scalar_prefetch = 0 : i64, scratch_operands = 0 : i64, tpu.core_type = #tpu.core_type<tc>, window_params = [{transform_indices = @transform_0, window_bounds = array<i64: 1, 2, 16>}, {transform_indices = @transform_1, window_bounds = array<i64: 1, 4, 2>}, {transform_indices = @transform_2, window_bounds = array<i64: 1, 4, 2>}, {pipeline_mode = #tpu.pipeline_mode<synchronous>, transform_indices = @transform_3, window_bounds = array<i64: 2, 4>}, {pipeline_mode = #tpu.pipeline_mode<synchronous>, transform_indices = @transform_4, window_bounds = array<i64: 4, 1>}, {transform_indices = @transform_5, window_bounds = array<i64: 1, 4, 16>}]} {
    %c0 = arith.constant 0 : index
    %c0_0 = arith.constant 0 : index
    %c0_1 = arith.constant 0 : index
    %0 = vector.load %arg2[%c0, %c0_0, %c0_1] : memref<1x2x16xbf16, #tpu.memory_space<vmem>>, vector<1x2x16xbf16>
    %1 = vector.shape_cast %0 : vector<1x2x16xbf16> to vector<2x16xbf16>
    %c0_2 = arith.constant 0 : index
    %c0_3 = arith.constant 0 : index
    %c0_4 = arith.constant 0 : index
    %2 = vector.load %arg3[%c0_2, %c0_3, %c0_4] : memref<1x4x2xbf16, #tpu.memory_space<vmem>>, vector<1x4x2xbf16>
    %3 = vector.shape_cast %2 : vector<1x4x2xbf16> to vector<4x2xbf16>
    %c0_5 = arith.constant 0 : index
    %c0_6 = arith.constant 0 : index
    %c0_7 = arith.constant 0 : index
    %4 = vector.load %arg4[%c0_5, %c0_6, %c0_7] : memref<1x4x2xbf16, #tpu.memory_space<vmem>>, vector<1x4x2xbf16>
    %5 = vector.shape_cast %4 : vector<1x4x2xbf16> to vector<4x2xbf16>
    %cst = arith.constant dense<0.000000e+00> : vector<16x4xf32>
    %6 = tpu.matmul %1, %3, %cst {dimension_numbers = #tpu.dot_dimension_numbers<[0], [1], [1], [0], [0, 1, 1, 0], [], []>} : vector<2x16xbf16>, vector<4x2xbf16>, vector<16x4xf32> -> vector<16x4xf32>
    %cst_8 = arith.constant dense<0xFF800000> : vector<16xf32>
    %7 = vector.multi_reduction <maximumf>, %6, %cst_8 [1] : vector<16x4xf32> to vector<16xf32>
    %8 = vector.shape_cast %7 : vector<16xf32> to vector<16x1xf32>
    %9 = vector.broadcast %8 : vector<16x1xf32> to vector<16x4xf32>
    %10 = arith.subf %6, %9 : vector<16x4xf32>
    %11 = math.exp %10 : vector<16x4xf32>
    %cst_9 = arith.constant dense<0.000000e+00> : vector<16xf32>
    %12 = vector.multi_reduction <add>, %11, %cst_9 [1] : vector<16x4xf32> to vector<16xf32>
    %13 = vector.shape_cast %12 : vector<16xf32> to vector<16x1xf32>
    %14 = tpu.reciprocal %13 {approx = true} : vector<16x1xf32> -> vector<16x1xf32>
    %15 = vector.broadcast %14 : vector<16x1xf32> to vector<16x4xf32>
    %16 = arith.mulf %11, %15 : vector<16x4xf32>
    %17 = arith.truncf %16 : vector<16x4xf32> to vector<16x4xbf16>
    %cst_10 = arith.constant dense<0.000000e+00> : vector<16x2xf32>
    %18 = tpu.matmul %17, %5, %cst_10 {dimension_numbers = #tpu.dot_dimension_numbers<[1], [0], [0], [1], [0, 0, 1, 1], [], []>} : vector<16x4xbf16>, vector<4x2xbf16>, vector<16x2xf32> -> vector<16x2xf32>
    %c0_11 = arith.constant 0 : index
    %c0_12 = arith.constant 0 : index
    %19 = vector.load %arg5[%c0_11, %c0_12] : memref<2x4xf32, #tpu.memory_space<vmem>>, vector<2x4xf32>
    %cst_13 = arith.constant dense<0.000000e+00> : vector<4x16xf32>
    %20 = tpu.matmul %19, %18, %cst_13 {dimension_numbers = #tpu.dot_dimension_numbers<[0], [1], [1], [0], [0, 1, 1, 0], [], []>} : vector<2x4xf32>, vector<16x2xf32>, vector<4x16xf32> -> vector<4x16xf32>
    %c0_14 = arith.constant 0 : index
    %c0_15 = arith.constant 0 : index
    %21 = vector.load %arg6[%c0_14, %c0_15] : memref<4x1xf32, #tpu.memory_space<vmem>>, vector<4x1xf32>
    %22 = vector.broadcast %21 : vector<4x1xf32> to vector<4x16xf32>
    %23 = arith.addf %20, %22 : vector<4x16xf32>
    %c0_16 = arith.constant 0 : index
    %c0_17 = arith.constant 0 : index
    %c0_18 = arith.constant 0 : index
    %24 = vector.load %arg7[%c0_16, %c0_17, %c0_18] : memref<1x4x16xf32, #tpu.memory_space<vmem>>, vector<1x4x16xf32>
    %25 = vector.shape_cast %24 : vector<1x4x16xf32> to vector<4x16xf32>
    %26 = vector.shape_cast %23 : vector<4x16xf32> to vector<1x4x16xf32>
    tpu.vector_store %arg7[%c0_16, %c0_17, %c0_18], %26 {strides = array<i32>} : memref<1x4x16xf32, #tpu.memory_space<vmem>>, vector<1x4x16xf32>,
    return
  }
  func.func @transform_0(%arg0: i32, %arg1: i32) -> (i32, i32, i32) {
    %c0_i32 = arith.constant 0 : i32
    %c0_i32_0 = arith.constant 0 : i32
    return %arg0, %c0_i32, %arg1 : i32, i32, i32
  }
  func.func @transform_1(%arg0: i32, %arg1: i32) -> (i32, i32, i32) {
    %c0_i32 = arith.constant 0 : i32
    %c0_i32_0 = arith.constant 0 : i32
    %c0_i32_1 = arith.constant 0 : i32
    return %arg0, %c0_i32, %c0_i32_0 : i32, i32, i32
  }
  func.func @transform_2(%arg0: i32, %arg1: i32) -> (i32, i32, i32) {
    %c0_i32 = arith.constant 0 : i32
    %c0_i32_0 = arith.constant 0 : i32
    %c0_i32_1 = arith.constant 0 : i32
    return %arg0, %c0_i32, %c0_i32_0 : i32, i32, i32
  }
  func.func @transform_3(%arg0: i32, %arg1: i32) -> (i32, i32) {
    %c0_i32 = arith.constant 0 : i32
    %c0_i32_0 = arith.constant 0 : i32
    %c0_i32_1 = arith.constant 0 : i32
    return %c0_i32, %c0_i32_0 : i32, i32
  }
  func.func @transform_4(%arg0: i32, %arg1: i32) -> (i32, i32) {
    %c0_i32 = arith.constant 0 : i32
    %c0_i32_0 = arith.constant 0 : i32
    %c0_i32_1 = arith.constant 0 : i32
    return %c0_i32, %c0_i32_0 : i32, i32
  }
  func.func @transform_5(%arg0: i32, %arg1: i32) -> (i32, i32, i32) {
    %c0_i32 = arith.constant 0 : i32
    %c0_i32_0 = arith.constant 0 : i32
    return %arg0, %c0_i32, %arg1 : i32, i32, i32
  }
}

</mosaic_0001>

<llo_original>
// kernel: _nlb_forward.5
$region0: #{_nlb_forward.5}
  #allocation0 [shape = 'u32[]', space=smem, size = 0x4, offset = 0x4, fixed_abs, tag = 'smem constant byte address 0x4 - core index']
  #allocation1 [shape = 'u32[144,128]{1,0:T(1,128)}', space=vmem, size = 0x12000, scoped, tag = 'internal scratch']
  %s0 = inlined_call_operand.hbm [shape: f32[2,4,16,16], index: 0, kind: input, shape index: {}, may-alias: {0,4}]
  %s1 = inlined_call_operand.vmem [shape: f32[2,4,4,4], index: 1, kind: input, shape index: {}]
  %s2 = inlined_call_operand.vmem [shape: f32[16,4], index: 2, kind: input, shape index: {}]
  %s3 = inlined_call_operand.vmem [shape: f32[4,16], index: 3, kind: input, shape index: {}]
  %s4 = inlined_call_operand.hbm [shape: f32[2,4,16,16], index: 4, kind: output, shape index: {}, may-alias: {0,4}]
  %s5 = sld [smem:[#allocation0]]
  $region53: #{_nlb_forward.5} parent=0
    _
  %s7 = ssub.s32 1, %s5
  %s8 = scalar_select 0, %s7, %s5
  $region1: #{_nlb_forward.5} parent=0
    #allocation2 [shape = 'u8[32768]{0}', space=vmem, size = 0x8000, scoped, tag = 'input window, operand 0']
    #allocation3 [shape = 's32[2]{0}', space=sflag, size = 0x8, scoped, tag = 'scoped memory for _nlb_forward.5']
    #allocation4 [shape = 's32[2]{0}', space=sflag, size = 0x8, scoped, tag = 'scoped memory for _nlb_forward.5']
    #allocation5 [shape = 'u8[32768]{0}', space=vmem, size = 0x8000, scoped, tag = 'output window, operand 0']
    %9 = vsyncpa [#allocation3], 0
    %s10 = scalar_lea.sflag [#allocation3], 1
    %11 = vsyncpa %s10, 0
    %12 = vsyncpa [#allocation4], 0
    %s13 = scalar_lea.sflag [#allocation4], 1
    %14 = vsyncpa %s13, 0
    loop: start=0, step=1, limit=6
    $region2: #{_nlb_forward.5} parent=1 // loop_pre_header
      _
    $region3: #{_nlb_forward.5} parent=1 // loop_header
      %s16 = sphi 0, %s20
      %p17 = scmp.ge.s32.totalorder %s16, 6
      %s23 = sphi 0, %s35
      %s24 = sphi 0, %s31
      %s25 = sphi 0, %s23
      %s26 = sphi 0, %s24
      %s27 = sphi 0, %s25
      %s28 = sphi 0, %s26
      %s40 = sphi 0, %s42
      %s43 = sphi 0, %s40
      %s44 = sphi 0, %s43
      %s60 = sphi 0, %s44
      %s66 = sphi 0, %s68
      %s69 = sphi 0, %s66
      %s70 = sphi 0, %s69
      %s86 = sphi 0, %s70
      %s92 = sphi 0, %s94
      %s95 = sphi 0, %s92
      %s96 = sphi 0, %s95
      %s112 = sphi 0, %s96
      %s116 = sphi 0, %s116
      %s118 = sphi 0, %s116
      %s119 = sphi 0, %s118
      %s133 = sphi 0, %s119
      %s141 = sphi 0, %s143
      %s144 = sphi 0, %s141
      %s145 = sphi 0, %s144
      %s161 = sphi 0, %s145
    $region4: #{_nlb_forward.5} parent=1 // loop_header_branch
      %19 = sbr.rel (%p17) target = $region8
    $region5: #{_nlb_forward.5} parent=1 // loop_body
      %s21 = ssub.s32 %s16, 1
      %s22 = ssub.s32 %s16, 2
      %s29 = sadd.s32 1, %s24
      %p30 = scmp.ge.s32.totalorder %s29, 2
      %s31 = scalar_select %p30, 0, %s29
      %s32 = sadd.s32 1, %s23
      %s33 = scalar_select %p30, %s32, %s23
      %p34 = scmp.ge.s32.totalorder %s33, 2
      %s35 = scalar_select %p34, 0, %s33
      %s36 = ssub.s32 %s23, %s35
      %s37 = ssub.s32 %s24, %s31
      %s38 = sor.u32 %s36, %s37
      %p39 = scmp.eq.s32.totalorder %s38, 0
      %s41 = sadd.s32 %s40, 1
      %s42 = scalar_select %p39, %s40, %s41
      %p45 = pneg %p39
      %p46 = scmp.eq.s32.totalorder %s16, 3
      %p47 = por %p45, %p46
      %p48 = scmp.ne.s32.totalorder %s40, %s43
      %p49 = scmp.eq.s32.totalorder %s16, 0
      %p50 = por %p48, %p49
      %p51 = scmp.ne.s32.totalorder %s40, %s43
      %p52 = scmp.eq.s32.totalorder %s21, 3
      %p53 = por %p51, %p52
      %p54 = scmp.ne.s32.totalorder %s43, %s44
      %p55 = scmp.eq.s32.totalorder %s21, 0
      %p56 = por %p54, %p55
      %p57 = scmp.ne.s32.totalorder %s43, %s44
      %p58 = scmp.eq.s32.totalorder %s22, 3
      %p59 = por %p57, %p58
      %p61 = scmp.ne.s32.totalorder %s44, %s60
      %p62 = scmp.eq.s32.totalorder %s22, 0
      %p63 = por %p61, %p62
      %s64 = ssub.s32 %s23, %s35
      %p65 = scmp.eq.s32.totalorder %s64, 0
      %s67 = sadd.s32 %s66, 1
      %s68 = scalar_select %p65, %s66, %s67
      %p71 = pneg %p65
      %p72 = scmp.eq.s32.totalorder %s16, 3
      %p73 = por %p71, %p72
      %p74 = scmp.ne.s32.totalorder %s66, %s69
      %p75 = scmp.eq.s32.totalorder %s16, 0
      %p76 = por %p74, %p75
      %p77 = scmp.ne.s32.totalorder %s66, %s69
      %p78 = scmp.eq.s32.totalorder %s21, 3
      %p79 = por %p77, %p78
      %p80 = scmp.ne.s32.totalorder %s69, %s70
      %p81 = scmp.eq.s32.totalorder %s21, 0
      %p82 = por %p80, %p81
      %p83 = scmp.ne.s32.totalorder %s69, %s70
      %p84 = scmp.eq.s32.totalorder %s22, 3
      %p85 = por %p83, %p84
      %p87 = scmp.ne.s32.totalorder %s70, %s86
      %p88 = scmp.eq.s32.totalorder %s22, 0
      %p89 = por %p87, %p88
      %s90 = ssub.s32 %s24, %s31
      %p91 = scmp.eq.s32.totalorder %s90, 0
      %s93 = sadd.s32 %s92, 1
      %s94 = scalar_select %p91, %s92, %s93
      %p97 = pneg %p91
      %p98 = scmp.eq.s32.totalorder %s16, 3
      %p99 = por %p97, %p98
      %p100 = scmp.ne.s32.totalorder %s92, %s95
      %p101 = scmp.eq.s32.totalorder %s16, 0
      %p102 = por %p100, %p101
      %p103 = scmp.ne.s32.totalorder %s92, %s95
      %p104 = scmp.eq.s32.totalorder %s21, 3
      %p105 = por %p103, %p104
      %p106 = scmp.ne.s32.totalorder %s95, %s96
      %p107 = scmp.eq.s32.totalorder %s21, 0
      %p108 = por %p106, %p107
      %p109 = scmp.ne.s32.totalorder %s95, %s96
      %p110 = scmp.eq.s32.totalorder %s22, 3
      %p111 = por %p109, %p110
      %p113 = scmp.ne.s32.totalorder %s96, %s112
      %p114 = scmp.eq.s32.totalorder %s22, 0
      %p115 = por %p113, %p114
      %s117 = sadd.s32 %s116, 1
      %p120 = scmp.eq.s32.totalorder %s16, 3
      %p121 = scmp.ne.s32.totalorder %s116, %s118
      %p122 = scmp.eq.s32.totalorder %s16, 0
      %p123 = por %p121, %p122
      %p124 = scmp.ne.s32.totalorder %s116, %s118
      %p125 = scmp.eq.s32.totalorder %s21, 3
      %p126 = por %p124, %p125
      %p127 = scmp.ne.s32.totalorder %s118, %s119
      %p128 = scmp.eq.s32.totalorder %s21, 0
      %p129 = por %p127, %p128
      %p130 = scmp.ne.s32.totalorder %s118, %s119
      %p131 = scmp.eq.s32.totalorder %s22, 3
      %p132 = por %p130, %p131
      %p134 = scmp.ne.s32.totalorder %s119, %s133
      %p135 = scmp.eq.s32.totalorder %s22, 0
      %p136 = por %p134, %p135
      %s137 = ssub.s32 %s23, %s35
      %s138 = ssub.s32 %s24, %s31
      %s139 = sor.u32 %s137, %s138
      %p140 = scmp.eq.s32.totalorder %s139, 0
      %s142 = sadd.s32 %s141, 1
      %s143 = scalar_select %p140, %s141, %s142
      %p146 = pneg %p140
      %p147 = scmp.eq.s32.totalorder %s16, 3
      %p148 = por %p146, %p147
      %p149 = scmp.ne.s32.totalorder %s141, %s144
      %p150 = scmp.eq.s32.totalorder %s16, 0
      %p151 = por %p149, %p150
      %p152 = scmp.ne.s32.totalorder %s141, %s144
      %p153 = scmp.eq.s32.totalorder %s21, 3
      %p154 = por %p152, %p153
      %p155 = scmp.ne.s32.totalorder %s144, %s145
      %p156 = scmp.eq.s32.totalorder %s21, 0
      %p157 = por %p155, %p156
      %p158 = scmp.ne.s32.totalorder %s144, %s145
      %p159 = scmp.eq.s32.totalorder %s22, 3
      %p160 = por %p158, %p159
      %p162 = scmp.ne.s32.totalorder %s145, %s161
      %p163 = scmp.eq.s32.totalorder %s22, 0
      %p164 = por %p162, %p163
      %p165 = scmp.le.s32.totalorder 1, %s16
      %p166 = scmp.lt.s32.totalorder %s16, 5
      %p167 = pnand %p165, %p166
      %p168 = pneg %p167
      // Predicated region
      $region9: #{_nlb_forward.5} parent=5 // pred_check
        _
      $region10: #{_nlb_forward.5} parent=5 // pred_check_branch
        %170 = sbr.rel (%p167) target = $region12
      $region11: #{_nlb_forward.5} parent=5 // pred_region
        %s171 = ssub.s32 %s16, 1
        // Predicated region
        $region13: #{_nlb_forward.5} parent=11 // pred_check
          %p172 = pneg %p129
        $region14: #{_nlb_forward.5} parent=11 // pred_check_branch
          %174 = sbr.rel (%p172) target = $region16
        $region15: #{_nlb_forward.5} parent=11 // pred_region
          _
        $region16: #{_nlb_forward.5} parent=11 // pred_fallthru
          _
      $region12: #{_nlb_forward.5} parent=5 // pred_fallthru
        _
      %p175 = scmp.lt.s32.totalorder %s16, 4
      // Predicated region
      $region17: #{_nlb_forward.5} parent=5 // pred_check
        %p176 = pneg %p175
      $region18: #{_nlb_forward.5} parent=5 // pred_check_branch
        %178 = sbr.rel (%p176) target = $region20
      $region19: #{_nlb_forward.5} parent=5 // pred_region
        // Predicated region
        $region21: #{_nlb_forward.5} parent=19 // pred_check
          %p179 = pneg %p50
        $region22: #{_nlb_forward.5} parent=19 // pred_check_branch
          %181 = sbr.rel (%p179) target = $region24
        $region23: #{_nlb_forward.5} parent=19 // pred_region
          %s182 = sand.u32 %s40, 1
          %s183 = scalar_lea.sflag [#allocation3], %s182
          %s184 = sand.u32 %s40, 1
          %s185 = smul.addr %s184, 32
          %s186 = scalar_lea.vmem [#allocation2], %s185
          %s188 = ssub.s32 512, 512
          %189 = vsyncadd %s183, %s188
          %s190 = smul.addr %s23, 8
          %s191 = sadd.s32 %s24, %s190
          %s192 = smul.addr %s191, 128
          %s193 = scalar_lea.hbm %s0, %s192
          %s194 = sshll.u32 %s186, 4
          %s195 = int_to_ptr.vmem [resolvable:$true] %s194
          %200 = dma.hbm_to_vmem [thread:$0]  %s193, 512, %s195, %s183, 256, 128, 8
        $region24: #{_nlb_forward.5} parent=19 // pred_fallthru
          _
        // Predicated region
        $region25: #{_nlb_forward.5} parent=19 // pred_check
          %p201 = pneg %p76
        $region26: #{_nlb_forward.5} parent=19 // pred_check_branch
          %203 = sbr.rel (%p201) target = $region28
        $region27: #{_nlb_forward.5} parent=19 // pred_region
          %p204 = scmp.lt.s32.totalorder %s23, 1
          %s205 = scalar_select %p204, %s23, 1
          %s206 = smul.addr %s205, 4
          %s207 = smul.addr %s206, 4
          %s208 = scalar_lea.vmem %s1, %s207
        $region28: #{_nlb_forward.5} parent=19 // pred_fallthru
          _
        // Predicated region
        $region29: #{_nlb_forward.5} parent=19 // pred_check
          %p209 = pneg %p102
        $region30: #{_nlb_forward.5} parent=19 // pred_check_branch
          %211 = sbr.rel (%p209) target = $region32
        $region31: #{_nlb_forward.5} parent=19 // pred_region
          %p212 = scmp.lt.s32.totalorder %s24, 1
          %s213 = scalar_select %p212, %s24, 1
          %s214 = smul.addr %s213, 8
          %s215 = scalar_lea.vmem %s2, %s214
        $region32: #{_nlb_forward.5} parent=19 // pred_fallthru
          _
      $region20: #{_nlb_forward.5} parent=5 // pred_fallthru
        _
      %p216 = scmp.le.s32.totalorder 1, %s16
      %p217 = scmp.lt.s32.totalorder %s16, 5
      %p218 = pnand %p216, %p217
      %p219 = pneg %p218
      // Predicated region
      $region33: #{_nlb_forward.5} parent=5 // pred_check
        _
      $region34: #{_nlb_forward.5} parent=5 // pred_check_branch
        %221 = sbr.rel (%p218) target = $region36
      $region35: #{_nlb_forward.5} parent=5 // pred_region
        %s222 = ssub.s32 %s16, 1
        %s223 = sand.u32 %s43, 1
        %s224 = scalar_lea.sflag [#allocation3], %s223
        %s225 = sand.u32 %s43, 1
        %s226 = smul.addr %s225, 32
        %s227 = scalar_lea.vmem [#allocation2], %s226
        // Predicated region
        $region37: #{_nlb_forward.5} parent=35 // pred_check
          %p228 = pneg %p56
        $region38: #{_nlb_forward.5} parent=35 // pred_check_branch
          %230 = sbr.rel (%p228) target = $region40
        $region39: #{_nlb_forward.5} parent=35 // pred_region
          %231 = dma.done %s224, 512
        $region40: #{_nlb_forward.5} parent=35 // pred_fallthru
          _
        %s232 = sand.u32 %s43, 1
        %s233 = scalar_lea.sflag [#allocation3], %s232
        %s234 = sand.u32 %s43, 1
        %s235 = smul.addr %s234, 32
        %s236 = scalar_lea.vmem [#allocation2], %s235
        %p237 = pneg %p56
        %p238 = pneg %p53
        %p239 = scmp.lt.s32.totalorder %s25, 1
        %s240 = scalar_select %p239, %s25, 1
        %s241 = smul.addr %s240, 4
        %s242 = smul.addr %s241, 4
        %s243 = scalar_lea.vmem %s1, %s242
        %p244 = pneg %p82
        %p245 = pneg %p79
        %p246 = scmp.lt.s32.totalorder %s26, 1
        %s247 = scalar_select %p246, %s26, 1
        %s248 = smul.addr %s247, 8
        %s249 = scalar_lea.vmem %s2, %s248
        %p250 = pneg %p108
        %p251 = pneg %p105
        %p252 = pneg %p129
        %p253 = pneg %p126
        %p254 = pneg %p157
        %p255 = pneg %p154
        %s256 = sand.u32 %s144, 1
        %s257 = scalar_lea.sflag [#allocation4], %s256
        %s258 = sand.u32 %s144, 1
        %s259 = smul.addr %s258, 32
        %s260 = scalar_lea.vmem [#allocation5], %s259
        %p261 = scmp.lt.s32.totalorder %s25, 1
        %s262 = scalar_select %p261, %s25, 1
        %s263 = smul.addr %s262, 4
        %s264 = smul.addr %s263, 4
        %s265 = scalar_lea.vmem %s1, %s264
        %p266 = scmp.lt.s32.totalorder %s26, 1
        %s267 = scalar_select %p266, %s26, 1
        %s268 = smul.addr %s267, 8
        %s269 = scalar_lea.vmem %s2, %s268
        %v270 = vld [vmem:[%s265] sm:$0xf]
        %v271 = vld [vmem:[%s265 + $0x4] sm:$0xf]
        %v272 = vld [vmem:[%s265 + $0x8] sm:$0xf]
        %v273 = vld [vmem:[%s265 + $0xc] sm:$0xf]
        %v274 = vld [vmem:[%s3] sm:$0xf]
        %v279 = vcombine.low %v270, %v271
        %v280 = vcombine.low %v272, %v273
        %vm281 = vcmask 31744
        %v282 = vsel %vm281, %v279, 0
        %v284 = vsel %vm281, %v280, 0
        %vm286 = vcmask 1043456
        %v288 = vsel %vm286, %v274, 0
        %290 = vmatprep.subr.mxu0 0.0
        %291 = vmatpush1.msra.mxu0 0.0
        %292 = vmatprep.subr.mxu0 0.0
        %293 = vmatpush1.msra.mxu0 0.0
        %294 = vmatprep.subr.mxu0 0.0
        %295 = vmatpush1.msra.mxu0 0.0
        %296 = vmatprep.subr.mxu0 0.0
        %297 = vmatpush1.msra.mxu0 0.0
        %298 = vmatprep.subr.mxu0 0.0
        %299 = vmatpush1.msra.mxu0 0.0
        %300 = vmatprep.subr.mxu0 0.0
        %301 = vmatpush1.msra.mxu0 0.0
        %302 = vmatprep.subr.mxu0 0.0
        %303 = vmatpush1.msra.mxu0 0.0
        %304 = vmatprep.subr.mxu0 0.0
        %305 = vmatpush1.msra.mxu0 0.0
        %306 = vmatprep.subr.mxu0 0.0
        %307 = vmatpush1.msra.mxu0 0.0
        %308 = vmatprep.subr.mxu0 0.0
        %309 = vmatpush1.msra.mxu0 0.0
        %310 = vmatprep.subr.mxu0 0.0
        %311 = vmatpush1.msra.mxu0 0.0
        %312 = vmatprep.subr.mxu0 0.0
        %313 = vmatpush1.msra.mxu0 0.0
        %314 = vmatprep.subr.mxu0 0.0
        %315 = vmatpush1.msra.mxu0 0.0
        %316 = vmatprep.subr.mxu0 0.0
        %317 = vmatpush1.msra.mxu0 0.0
        %318 = vmatprep.subr.mxu0 0.0
        %319 = vmatpush1.msra.mxu0 0.0
        %320 = vmatprep.subr.mxu0 0.0
        %321 = vmatpush1.msra.mxu0 %v288
        %322 = vmatprep.subr.mxu0 0.0
        %323 = vmatpush2.msra.mxu0 0.0
        %324 = vmatprep.subr.mxu0 0.0
        %325 = vmatpush2.msra.mxu0 0.0
        %326 = vmatprep.subr.mxu0 0.0
        %327 = vmatpush2.msra.mxu0 0.0
        %328 = vmatprep.subr.mxu0 0.0
        %329 = vmatpush2.msra.mxu0 0.0
        %330 = vmatprep.subr.mxu0 0.0
        %331 = vmatpush2.msra.mxu0 0.0
        %332 = vmatprep.subr.mxu0 0.0
        %333 = vmatpush2.msra.mxu0 0.0
        %334 = vmatprep.subr.mxu0 0.0
        %335 = vmatpush2.msra.mxu0 0.0
        %336 = vmatprep.subr.mxu0 0.0
        %337 = vmatpush2.msra.mxu0 0.0
        %338 = vmatprep.subr.mxu0 0.0
        %339 = vmatpush2.msra.mxu0 0.0
        %340 = vmatprep.subr.mxu0 0.0
        %341 = vmatpush2.msra.mxu0 0.0
        %342 = vmatprep.subr.mxu0 0.0
        %343 = vmatpush2.msra.mxu0 0.0
        %344 = vmatprep.subr.mxu0 0.0
        %345 = vmatpush2.msra.mxu0 0.0
        %346 = vmatprep.subr.mxu0 0.0
        %347 = vmatpush2.msra.mxu0 0.0
        %348 = vmatprep.subr.mxu0 0.0
        %349 = vmatpush2.msra.mxu0 0.0
        %350 = vmatprep.subr.mxu0 0.0
        %351 = vmatpush2.msra.mxu0 0.0
        %352 = vmatprep.subr.mxu0 0.0
        %353 = vmatpush2.msra.mxu0 0.0
        %354 = vmatprep.mubr.f32.mxu0 0.0
        %355 = vmatmul.mubr.f32.gmra.mxu0 %v282
        %v356 = vpop.f32.mrf.mxu0
        %v357 = vadd.f32 0.0, %v356
        %v358 = vpop.f32.mrf.mxu0
        %359 = vmatprep.mubr.f32.mxu0 0.0
        %360 = vmatmul.mubr.f32.gmra.mxu0 %v284
        %v361 = vpop.f32.mrf.mxu0
        %v362 = vadd.f32 0.0, %v361
        %v363 = vpop.f32.mrf.mxu0
        %364 = vdwg.mxu0
        %v365 = vld [vmem:[%s269] sm:$0xff]
        %v368 = vcombine.high %v357, %v357
        %v369 = vcombine.high %v362, %v362
        %v371 = vsel %vm281, %v365, 0
        %v373 = vsel %vm286, %v357, 0
        %375 = vmatprep.subr.mxu0 0.0
        %376 = vmatpush1.msra.mxu0 0.0
        %377 = vmatprep.subr.mxu0 0.0
        %378 = vmatpush1.msra.mxu0 0.0
        %379 = vmatprep.subr.mxu0 0.0
        %380 = vmatpush1.msra.mxu0 0.0
        %381 = vmatprep.subr.mxu0 0.0
        %382 = vmatpush1.msra.mxu0 0.0
        %383 = vmatprep.subr.mxu0 0.0
        %384 = vmatpush1.msra.mxu0 0.0
        %385 = vmatprep.subr.mxu0 0.0
        %386 = vmatpush1.msra.mxu0 0.0
        %387 = vmatprep.subr.mxu0 0.0
        %388 = vmatpush1.msra.mxu0 0.0
        %389 = vmatprep.subr.mxu0 0.0
        %390 = vmatpush1.msra.mxu0 0.0
        %391 = vmatprep.subr.mxu0 0.0
        %392 = vmatpush1.msra.mxu0 0.0
        %393 = vmatprep.subr.mxu0 0.0
        %394 = vmatpush1.msra.mxu0 0.0
        %395 = vmatprep.subr.mxu0 0.0
        %396 = vmatpush1.msra.mxu0 0.0
        %397 = vmatprep.subr.mxu0 0.0
        %398 = vmatpush1.msra.mxu0 0.0
        %399 = vmatprep.subr.mxu0 0.0
        %400 = vmatpush1.msra.mxu0 0.0
        %401 = vmatprep.subr.mxu0 0.0
        %402 = vmatpush1.msra.mxu0 0.0
        %403 = vmatprep.subr.mxu0 0.0
        %404 = vmatpush1.msra.mxu0 0.0
        %405 = vmatprep.subr.mxu0 0.0
        %406 = vmatpush1.msra.mxu0 %v373
        %407 = vmatprep.subr.mxu0 0.0
        %408 = vmatpush2.msra.mxu0 0.0
        %409 = vmatprep.subr.mxu0 0.0
        %410 = vmatpush2.msra.mxu0 0.0
        %411 = vmatprep.subr.mxu0 0.0
        %412 = vmatpush2.msra.mxu0 0.0
        %413 = vmatprep.subr.mxu0 0.0
        %414 = vmatpush2.msra.mxu0 0.0
        %415 = vmatprep.subr.mxu0 0.0
        %416 = vmatpush2.msra.mxu0 0.0
        %417 = vmatprep.subr.mxu0 0.0
        %418 = vmatpush2.msra.mxu0 0.0
        %419 = vmatprep.subr.mxu0 0.0
        %420 = vmatpush2.msra.mxu0 0.0
        %421 = vmatprep.subr.mxu0 0.0
        %422 = vmatpush2.msra.mxu0 0.0
        %423 = vmatprep.subr.mxu0 0.0
        %424 = vmatpush2.msra.mxu0 0.0
        %425 = vmatprep.subr.mxu0 0.0
        %426 = vmatpush2.msra.mxu0 0.0
        %427 = vmatprep.subr.mxu0 0.0
        %428 = vmatpush2.msra.mxu0 0.0
        %429 = vmatprep.subr.mxu0 0.0
        %430 = vmatpush2.msra.mxu0 0.0
        %431 = vmatprep.subr.mxu0 0.0
        %432 = vmatpush2.msra.mxu0 0.0
        %433 = vmatprep.subr.mxu0 0.0
        %434 = vmatpush2.msra.mxu0 0.0
        %435 = vmatprep.subr.mxu0 0.0
        %436 = vmatpush2.msra.mxu0 0.0
        %437 = vmatprep.subr.mxu0 0.0
        %438 = vmatpush2.msra.mxu0 0.0
        %439 = vmatprep.mubr.f32.mxu0 0.0
        %440 = vmatmul.mubr.f32.gmra.mxu0 %v371
        %v441 = vpop.f32.mrf.mxu0
        %v442 = vadd.f32 0.0, %v441
        %v443 = vpop.f32.mrf.mxu0
        %444 = vdwg.mxu0
        %v445 = vsel %vm286, %v368, 0
        %447 = vmatprep.subr.mxu0 0.0
        %448 = vmatpush1.msra.mxu0 0.0
        %449 = vmatprep.subr.mxu0 0.0
        %450 = vmatpush1.msra.mxu0 0.0
        %451 = vmatprep.subr.mxu0 0.0
        %452 = vmatpush1.msra.mxu0 0.0
        %453 = vmatprep.subr.mxu0 0.0
        %454 = vmatpush1.msra.mxu0 0.0
        %455 = vmatprep.subr.mxu0 0.0
        %456 = vmatpush1.msra.mxu0 0.0
        %457 = vmatprep.subr.mxu0 0.0
        %458 = vmatpush1.msra.mxu0 0.0
        %459 = vmatprep.subr.mxu0 0.0
        %460 = vmatpush1.msra.mxu0 0.0
        %461 = vmatprep.subr.mxu0 0.0
        %462 = vmatpush1.msra.mxu0 0.0
        %463 = vmatprep.subr.mxu0 0.0
        %464 = vmatpush1.msra.mxu0 0.0
        %465 = vmatprep.subr.mxu0 0.0
        %466 = vmatpush1.msra.mxu0 0.0
        %467 = vmatprep.subr.mxu0 0.0
        %468 = vmatpush1.msra.mxu0 0.0
        %469 = vmatprep.subr.mxu0 0.0
        %470 = vmatpush1.msra.mxu0 0.0
        %471 = vmatprep.subr.mxu0 0.0
        %472 = vmatpush1.msra.mxu0 0.0
        %473 = vmatprep.subr.mxu0 0.0
        %474 = vmatpush1.msra.mxu0 0.0
        %475 = vmatprep.subr.mxu0 0.0
        %476 = vmatpush1.msra.mxu0 0.0
        %477 = vmatprep.subr.mxu0 0.0
        %478 = vmatpush1.msra.mxu0 %v445
        %479 = vmatprep.subr.mxu0 0.0
        %480 = vmatpush2.msra.mxu0 0.0
        %481 = vmatprep.subr.mxu0 0.0
        %482 = vmatpush2.msra.mxu0 0.0
        %483 = vmatprep.subr.mxu0 0.0
        %484 = vmatpush2.msra.mxu0 0.0
        %485 = vmatprep.subr.mxu0 0.0
        %486 = vmatpush2.msra.mxu0 0.0
        %487 = vmatprep.subr.mxu0 0.0
        %488 = vmatpush2.msra.mxu0 0.0
        %489 = vmatprep.subr.mxu0 0.0
        %490 = vmatpush2.msra.mxu0 0.0
        %491 = vmatprep.subr.mxu0 0.0
        %492 = vmatpush2.msra.mxu0 0.0
        %493 = vmatprep.subr.mxu0 0.0
        %494 = vmatpush2.msra.mxu0 0.0
        %495 = vmatprep.subr.mxu0 0.0
        %496 = vmatpush2.msra.mxu0 0.0
        %497 = vmatprep.subr.mxu0 0.0
        %498 = vmatpush2.msra.mxu0 0.0
        %499 = vmatprep.subr.mxu0 0.0
        %500 = vmatpush2.msra.mxu0 0.0
        %501 = vmatprep.subr.mxu0 0.0
        %502 = vmatpush2.msra.mxu0 0.0
        %503 = vmatprep.subr.mxu0 0.0
        %504 = vmatpush2.msra.mxu0 0.0
        %505 = vmatprep.subr.mxu0 0.0
        %506 = vmatpush2.msra.mxu0 0.0
        %507 = vmatprep.subr.mxu0 0.0
        %508 = vmatpush2.msra.mxu0 0.0
        %509 = vmatprep.subr.mxu0 0.0
        %510 = vmatpush2.msra.mxu0 0.0
        %511 = vmatprep.mubr.f32.mxu0 0.0
        %512 = vmatmul.mubr.f32.gmra.mxu0 %v371
        %v513 = vpop.f32.mrf.mxu0
        %v514 = vadd.f32 0.0, %v513
        %v515 = vpop.f32.mrf.mxu0
        %516 = vdwg.mxu0
        %v517 = vsel %vm286, %v362, 0
        %519 = vmatprep.subr.mxu0 0.0
        %520 = vmatpush1.msra.mxu0 0.0
        %521 = vmatprep.subr.mxu0 0.0
        %522 = vmatpush1.msra.mxu0 0.0
        %523 = vmatprep.subr.mxu0 0.0
        %524 = vmatpush1.msra.mxu0 0.0
        %525 = vmatprep.subr.mxu0 0.0
        %526 = vmatpush1.msra.mxu0 0.0
        %527 = vmatprep.subr.mxu0 0.0
        %528 = vmatpush1.msra.mxu0 0.0
        %529 = vmatprep.subr.mxu0 0.0
        %530 = vmatpush1.msra.mxu0 0.0
        %531 = vmatprep.subr.mxu0 0.0
        %532 = vmatpush1.msra.mxu0 0.0
        %533 = vmatprep.subr.mxu0 0.0
        %534 = vmatpush1.msra.mxu0 0.0
        %535 = vmatprep.subr.mxu0 0.0
        %536 = vmatpush1.msra.mxu0 0.0
        %537 = vmatprep.subr.mxu0 0.0
        %538 = vmatpush1.msra.mxu0 0.0
        %539 = vmatprep.subr.mxu0 0.0
        %540 = vmatpush1.msra.mxu0 0.0
        %541 = vmatprep.subr.mxu0 0.0
        %542 = vmatpush1.msra.mxu0 0.0
        %543 = vmatprep.subr.mxu0 0.0
        %544 = vmatpush1.msra.mxu0 0.0
        %545 = vmatprep.subr.mxu0 0.0
        %546 = vmatpush1.msra.mxu0 0.0
        %547 = vmatprep.subr.mxu0 0.0
        %548 = vmatpush1.msra.mxu0 0.0
        %549 = vmatprep.subr.mxu0 0.0
        %550 = vmatpush1.msra.mxu0 %v517
        %551 = vmatprep.subr.mxu0 0.0
        %552 = vmatpush2.msra.mxu0 0.0
        %553 = vmatprep.subr.mxu0 0.0
        %554 = vmatpush2.msra.mxu0 0.0
        %555 = vmatprep.subr.mxu0 0.0
        %556 = vmatpush2.msra.mxu0 0.0
        %557 = vmatprep.subr.mxu0 0.0
        %558 = vmatpush2.msra.mxu0 0.0
        %559 = vmatprep.subr.mxu0 0.0
        %560 = vmatpush2.msra.mxu0 0.0
        %561 = vmatprep.subr.mxu0 0.0
        %562 = vmatpush2.msra.mxu0 0.0
        %563 = vmatprep.subr.mxu0 0.0
        %564 = vmatpush2.msra.mxu0 0.0
        %565 = vmatprep.subr.mxu0 0.0
        %566 = vmatpush2.msra.mxu0 0.0
        %567 = vmatprep.subr.mxu0 0.0
        %568 = vmatpush2.msra.mxu0 0.0
        %569 = vmatprep.subr.mxu0 0.0
        %570 = vmatpush2.msra.mxu0 0.0
        %571 = vmatprep.subr.mxu0 0.0
        %572 = vmatpush2.msra.mxu0 0.0
        %573 = vmatprep.subr.mxu0 0.0
        %574 = vmatpush2.msra.mxu0 0.0
        %575 = vmatprep.subr.mxu0 0.0
        %576 = vmatpush2.msra.mxu0 0.0
        %577 = vmatprep.subr.mxu0 0.0
        %578 = vmatpush2.msra.mxu0 0.0
        %579 = vmatprep.subr.mxu0 0.0
        %580 = vmatpush2.msra.mxu0 0.0
        %581 = vmatprep.subr.mxu0 0.0
        %582 = vmatpush2.msra.mxu0 0.0
        %583 = vmatprep.mubr.f32.mxu0 0.0
        %584 = vmatmul.mubr.f32.gmra.mxu0 %v371
        %v585 = vpop.f32.mrf.mxu0
        %v586 = vadd.f32 0.0, %v585
        %v587 = vpop.f32.mrf.mxu0
        %588 = vdwg.mxu0
        %v589 = vsel %vm286, %v369, 0
        %591 = vmatprep.subr.mxu0 0.0
        %592 = vmatpush1.msra.mxu0 0.0
        %593 = vmatprep.subr.mxu0 0.0
        %594 = vmatpush1.msra.mxu0 0.0
        %595 = vmatprep.subr.mxu0 0.0
        %596 = vmatpush1.msra.mxu0 0.0
        %597 = vmatprep.subr.mxu0 0.0
        %598 = vmatpush1.msra.mxu0 0.0
        %599 = vmatprep.subr.mxu0 0.0
        %600 = vmatpush1.msra.mxu0 0.0
        %601 = vmatprep.subr.mxu0 0.0
        %602 = vmatpush1.msra.mxu0 0.0
        %603 = vmatprep.subr.mxu0 0.0
        %604 = vmatpush1.msra.mxu0 0.0
        %605 = vmatprep.subr.mxu0 0.0
        %606 = vmatpush1.msra.mxu0 0.0
        %607 = vmatprep.subr.mxu0 0.0
        %608 = vmatpush1.msra.mxu0 0.0
        %609 = vmatprep.subr.mxu0 0.0
        %610 = vmatpush1.msra.mxu0 0.0
        %611 = vmatprep.subr.mxu0 0.0
        %612 = vmatpush1.msra.mxu0 0.0
        %613 = vmatprep.subr.mxu0 0.0
        %614 = vmatpush1.msra.mxu0 0.0
        %615 = vmatprep.subr.mxu0 0.0
        %616 = vmatpush1.msra.mxu0 0.0
        %617 = vmatprep.subr.mxu0 0.0
        %618 = vmatpush1.msra.mxu0 0.0
        %619 = vmatprep.subr.mxu0 0.0
        %620 = vmatpush1.msra.mxu0 0.0
        %621 = vmatprep.subr.mxu0 0.0
        %622 = vmatpush1.msra.mxu0 %v589
        %623 = vmatprep.subr.mxu0 0.0
        %624 = vmatpush2.msra.mxu0 0.0
        %625 = vmatprep.subr.mxu0 0.0
        %626 = vmatpush2.msra.mxu0 0.0
        %627 = vmatprep.subr.mxu0 0.0
        %628 = vmatpush2.msra.mxu0 0.0
        %629 = vmatprep.subr.mxu0 0.0
        %630 = vmatpush2.msra.mxu0 0.0
        %631 = vmatprep.subr.mxu0 0.0
        %632 = vmatpush2.msra.mxu0 0.0
        %633 = vmatprep.subr.mxu0 0.0
        %634 = vmatpush2.msra.mxu0 0.0
        %635 = vmatprep.subr.mxu0 0.0
        %636 = vmatpush2.msra.mxu0 0.0
        %637 = vmatprep.subr.mxu0 0.0
        %638 = vmatpush2.msra.mxu0 0.0
        %639 = vmatprep.subr.mxu0 0.0
        %640 = vmatpush2.msra.mxu0 0.0
        %641 = vmatprep.subr.mxu0 0.0
        %642 = vmatpush2.msra.mxu0 0.0
        %643 = vmatprep.subr.mxu0 0.0
        %644 = vmatpush2.msra.mxu0 0.0
        %645 = vmatprep.subr.mxu0 0.0
        %646 = vmatpush2.msra.mxu0 0.0
        %647 = vmatprep.subr.mxu0 0.0
        %648 = vmatpush2.msra.mxu0 0.0
        %649 = vmatprep.subr.mxu0 0.0
        %650 = vmatpush2.msra.mxu0 0.0
        %651 = vmatprep.subr.mxu0 0.0
        %652 = vmatpush2.msra.mxu0 0.0
        %653 = vmatprep.subr.mxu0 0.0
        %654 = vmatpush2.msra.mxu0 0.0
        %655 = vmatprep.mubr.f32.mxu0 0.0
        %656 = vmatmul.mubr.f32.gmra.mxu0 %v371
        %v657 = vpop.f32.mrf.mxu0
        %v658 = vadd.f32 0.0, %v657
        %v659 = vpop.f32.mrf.mxu0
        %660 = vdwg.mxu0
        %v661 = vld [vmem:[%s227] sm:$0xff]
        %v662 = vld [vmem:[%s227 + $0x8] sm:$0xff]
        %v663 = vld [vmem:[%s227 + $0x10] sm:$0xff]
        %v664 = vld [vmem:[%s227 + $0x18] sm:$0xff]
        %v665 = vadd.f32 %v661, %v442
        %v666 = vadd.f32 %v662, %v514
        %v667 = vadd.f32 %v663, %v586
        %v668 = vadd.f32 %v664, %v658
        %vm669 = vcmask 130048
        %670 = vst.msk [vmem:[%s260] sm:$0xff] %vm669, %v665
        %671 = vst.msk [vmem:[%s260 + $0x8] sm:$0xff] %vm669, %v666
        %672 = vst.msk [vmem:[%s260 + $0x10] sm:$0xff] %vm669, %v667
        %673 = vst.msk [vmem:[%s260 + $0x18] sm:$0xff] %vm669, %v668
        %s674 = sand.u32 %s144, 1
        %s675 = scalar_lea.sflag [#allocation4], %s674
        %s676 = sand.u32 %s144, 1
        %s677 = smul.addr %s676, 32
        %s678 = scalar_lea.vmem [#allocation5], %s677
        // Predicated region
        $region41: #{_nlb_forward.5} parent=35 // pred_check
          %p679 = pneg %p154
        $region42: #{_nlb_forward.5} parent=35 // pred_check_branch
          %681 = sbr.rel (%p679) target = $region44
        $region43: #{_nlb_forward.5} parent=35 // pred_region
          %s683 = ssub.s32 512, 512
          %684 = vsyncadd %s675, %s683
          %s685 = smul.addr %s25, 8
          %s686 = sadd.s32 %s26, %s685
          %s687 = smul.addr %s686, 128
          %s688 = scalar_lea.hbm %s4, %s687
          %s689 = sshll.u32 %s678, 4
          %s690 = int_to_ptr.vmem [resolvable:$true] %s689
          %695 = dma.vmem_to_hbm [thread:$0]  %s690, 512, %s688, %s675, 128, 256, 8
        $region44: #{_nlb_forward.5} parent=35 // pred_fallthru
          _
      $region36: #{_nlb_forward.5} parent=5 // pred_fallthru
        _
      %p696 = scmp.le.s32.totalorder 2, %s16
      // Predicated region
      $region45: #{_nlb_forward.5} parent=5 // pred_check
        %p697 = pneg %p696
      $region46: #{_nlb_forward.5} parent=5 // pred_check_branch
        %699 = sbr.rel (%p697) target = $region48
      $region47: #{_nlb_forward.5} parent=5 // pred_region
        %s700 = ssub.s32 %s16, 2
        // Predicated region
        $region49: #{_nlb_forward.5} parent=47 // pred_check
          %p701 = pneg %p160
        $region50: #{_nlb_forward.5} parent=47 // pred_check_branch
          %703 = sbr.rel (%p701) target = $region52
        $region51: #{_nlb_forward.5} parent=47 // pred_region
          %s704 = sand.u32 %s145, 1
          %s705 = scalar_lea.sflag [#allocation4], %s704
          %s706 = sand.u32 %s145, 1
          %s707 = smul.addr %s706, 32
          %s708 = scalar_lea.vmem [#allocation5], %s707
          %709 = dma.done %s705, 512
        $region52: #{_nlb_forward.5} parent=47 // pred_fallthru
          _
      $region48: #{_nlb_forward.5} parent=5 // pred_fallthru
        _
    $region6: #{_nlb_forward.5} parent=1 // loop_footer
      %s20 = sadd.s32 1, %s16
    $region7: #{_nlb_forward.5} parent=1 // loop_footer_branch
      %15 = sbr.rel target = $region3
    $region8: #{_nlb_forward.5} parent=1 // loop_exit
      _
    %710 = vsyncpa [#allocation3], 1
    %s711 = scalar_lea.sflag [#allocation3], 1
    %712 = vsyncpa %s711, 1
    %713 = vsyncpa [#allocation4], 1
    %s714 = scalar_lea.sflag [#allocation4], 1
    %715 = vsyncpa %s714, 1

// kernel: _nlb_forward.4
$region0: #{_nlb_forward.4}
  #allocation0 [shape = 'u32[]', space=smem, size = 0x4, offset = 0x4, fixed_abs, tag = 'smem constant byte address 0x4 - core index']
  #allocation1 [shape = 'u32[144,128]{1,0:T(1,128)}', space=vmem, size = 0x12000, scoped, tag = 'internal scratch']
  %s0 = inlined_call_operand.vmem [shape: bf16[2,2,16], index: 0, kind: input, shape index: {}]
  %s1 = inlined_call_operand.vmem [shape: bf16[2,4,2], index: 1, kind: input, shape index: {}]
  %s2 = inlined_call_operand.vmem [shape: bf16[2,4,2], index: 2, kind: input, shape index: {}]
  %s3 = inlined_call_operand.vmem [shape: f32[2,4], index: 3, kind: input, shape index: {}]
  %s4 = inlined_call_operand.vmem [shape: f32[4,1], index: 4, kind: input, shape index: {}]
  %s5 = inlined_call_operand.vmem [shape: f32[2,4,16], index: 5, kind: output, shape index: {}]
  %s6 = sld [smem:[#allocation0]]
  $region53: #{_nlb_forward.4} parent=0
    _
  %s8 = ssub.s32 1, %s6
  %s9 = scalar_select 0, %s8, %s6
  loop: start=0, step=1, limit=4
  $region2: #{_nlb_forward.4} parent=0 // loop_pre_header
    _
  $region3: #{_nlb_forward.4} parent=0 // loop_header
    %s11 = sphi 0, %s15
    %p12 = scmp.ge.s32.totalorder %s11, 4
    %s18 = sphi 0, %s30
    %s19 = sphi 0, %s26
    %s20 = sphi 0, %s18
    %s21 = sphi 0, %s19
    %s22 = sphi 0, %s20
    %s23 = sphi 0, %s21
    %s35 = sphi 0, %s37
    %s38 = sphi 0, %s35
    %s39 = sphi 0, %s38
    %s55 = sphi 0, %s39
    %s61 = sphi 0, %s63
    %s64 = sphi 0, %s61
    %s65 = sphi 0, %s64
    %s81 = sphi 0, %s65
    %s87 = sphi 0, %s89
    %s90 = sphi 0, %s87
    %s91 = sphi 0, %s90
    %s107 = sphi 0, %s91
    %s111 = sphi 0, %s111
    %s113 = sphi 0, %s111
    %s114 = sphi 0, %s113
    %s128 = sphi 0, %s114
    %s132 = sphi 0, %s132
    %s134 = sphi 0, %s132
    %s135 = sphi 0, %s134
    %s149 = sphi 0, %s135
    %s157 = sphi 0, %s159
    %s160 = sphi 0, %s157
    %s161 = sphi 0, %s160
    %s177 = sphi 0, %s161
  $region4: #{_nlb_forward.4} parent=0 // loop_header_branch
    %14 = sbr.rel (%p12) target = $region8
  $region5: #{_nlb_forward.4} parent=0 // loop_body
    %s16 = ssub.s32 %s11, 1
    %s17 = ssub.s32 %s11, 2
    %s24 = sadd.s32 1, %s19
    %p25 = scmp.ge.s32.totalorder %s24, 1
    %s26 = scalar_select %p25, 0, %s24
    %s27 = sadd.s32 1, %s18
    %s28 = scalar_select %p25, %s27, %s18
    %p29 = scmp.ge.s32.totalorder %s28, 2
    %s30 = scalar_select %p29, 0, %s28
    %s31 = ssub.s32 %s18, %s30
    %s32 = ssub.s32 %s19, %s26
    %s33 = sor.u32 %s31, %s32
    %p34 = scmp.eq.s32.totalorder %s33, 0
    %s36 = sadd.s32 %s35, 1
    %s37 = scalar_select %p34, %s35, %s36
    %p40 = pneg %p34
    %p41 = scmp.eq.s32.totalorder %s11, 1
    %p42 = por %p40, %p41
    %p43 = scmp.ne.s32.totalorder %s35, %s38
    %p44 = scmp.eq.s32.totalorder %s11, 0
    %p45 = por %p43, %p44
    %p46 = scmp.ne.s32.totalorder %s35, %s38
    %p47 = scmp.eq.s32.totalorder %s16, 1
    %p48 = por %p46, %p47
    %p49 = scmp.ne.s32.totalorder %s38, %s39
    %p50 = scmp.eq.s32.totalorder %s16, 0
    %p51 = por %p49, %p50
    %p52 = scmp.ne.s32.totalorder %s38, %s39
    %p53 = scmp.eq.s32.totalorder %s17, 1
    %p54 = por %p52, %p53
    %p56 = scmp.ne.s32.totalorder %s39, %s55
    %p57 = scmp.eq.s32.totalorder %s17, 0
    %p58 = por %p56, %p57
    %s59 = ssub.s32 %s18, %s30
    %p60 = scmp.eq.s32.totalorder %s59, 0
    %s62 = sadd.s32 %s61, 1
    %s63 = scalar_select %p60, %s61, %s62
    %p66 = pneg %p60
    %p67 = scmp.eq.s32.totalorder %s11, 1
    %p68 = por %p66, %p67
    %p69 = scmp.ne.s32.totalorder %s61, %s64
    %p70 = scmp.eq.s32.totalorder %s11, 0
    %p71 = por %p69, %p70
    %p72 = scmp.ne.s32.totalorder %s61, %s64
    %p73 = scmp.eq.s32.totalorder %s16, 1
    %p74 = por %p72, %p73
    %p75 = scmp.ne.s32.totalorder %s64, %s65
    %p76 = scmp.eq.s32.totalorder %s16, 0
    %p77 = por %p75, %p76
    %p78 = scmp.ne.s32.totalorder %s64, %s65
    %p79 = scmp.eq.s32.totalorder %s17, 1
    %p80 = por %p78, %p79
    %p82 = scmp.ne.s32.totalorder %s65, %s81
    %p83 = scmp.eq.s32.totalorder %s17, 0
    %p84 = por %p82, %p83
    %s85 = ssub.s32 %s18, %s30
    %p86 = scmp.eq.s32.totalorder %s85, 0
    %s88 = sadd.s32 %s87, 1
    %s89 = scalar_select %p86, %s87, %s88
    %p92 = pneg %p86
    %p93 = scmp.eq.s32.totalorder %s11, 1
    %p94 = por %p92, %p93
    %p95 = scmp.ne.s32.totalorder %s87, %s90
    %p96 = scmp.eq.s32.totalorder %s11, 0
    %p97 = por %p95, %p96
    %p98 = scmp.ne.s32.totalorder %s87, %s90
    %p99 = scmp.eq.s32.totalorder %s16, 1
    %p100 = por %p98, %p99
    %p101 = scmp.ne.s32.totalorder %s90, %s91
    %p102 = scmp.eq.s32.totalorder %s16, 0
    %p103 = por %p101, %p102
    %p104 = scmp.ne.s32.totalorder %s90, %s91
    %p105 = scmp.eq.s32.totalorder %s17, 1
    %p106 = por %p104, %p105
    %p108 = scmp.ne.s32.totalorder %s91, %s107
    %p109 = scmp.eq.s32.totalorder %s17, 0
    %p110 = por %p108, %p109
    %s112 = sadd.s32 %s111, 1
    %p115 = scmp.eq.s32.totalorder %s11, 1
    %p116 = scmp.ne.s32.totalorder %s111, %s113
    %p117 = scmp.eq.s32.totalorder %s11, 0
    %p118 = por %p116, %p117
    %p119 = scmp.ne.s32.totalorder %s111, %s113
    %p120 = scmp.eq.s32.totalorder %s16, 1
    %p121 = por %p119, %p120
    %p122 = scmp.ne.s32.totalorder %s113, %s114
    %p123 = scmp.eq.s32.totalorder %s16, 0
    %p124 = por %p122, %p123
    %p125 = scmp.ne.s32.totalorder %s113, %s114
    %p126 = scmp.eq.s32.totalorder %s17, 1
    %p127 = por %p125, %p126
    %p129 = scmp.ne.s32.totalorder %s114, %s128
    %p130 = scmp.eq.s32.totalorder %s17, 0
    %p131 = por %p129, %p130
    %s133 = sadd.s32 %s132, 1
    %p136 = scmp.eq.s32.totalorder %s11, 1
    %p137 = scmp.ne.s32.totalorder %s132, %s134
    %p138 = scmp.eq.s32.totalorder %s11, 0
    %p139 = por %p137, %p138
    %p140 = scmp.ne.s32.totalorder %s132, %s134
    %p141 = scmp.eq.s32.totalorder %s16, 1
    %p142 = por %p140, %p141
    %p143 = scmp.ne.s32.totalorder %s134, %s135
    %p144 = scmp.eq.s32.totalorder %s16, 0
    %p145 = por %p143, %p144
    %p146 = scmp.ne.s32.totalorder %s134, %s135
    %p147 = scmp.eq.s32.totalorder %s17, 1
    %p148 = por %p146, %p147
    %p150 = scmp.ne.s32.totalorder %s135, %s149
    %p151 = scmp.eq.s32.totalorder %s17, 0
    %p152 = por %p150, %p151
    %s153 = ssub.s32 %s18, %s30
    %s154 = ssub.s32 %s19, %s26
    %s155 = sor.u32 %s153, %s154
    %p156 = scmp.eq.s32.totalorder %s155, 0
    %s158 = sadd.s32 %s157, 1
    %s159 = scalar_select %p156, %s157, %s158
    %p162 = pneg %p156
    %p163 = scmp.eq.s32.totalorder %s11, 1
    %p164 = por %p162, %p163
    %p165 = scmp.ne.s32.totalorder %s157, %s160
    %p166 = scmp.eq.s32.totalorder %s11, 0
    %p167 = por %p165, %p166
    %p168 = scmp.ne.s32.totalorder %s157, %s160
    %p169 = scmp.eq.s32.totalorder %s16, 1
    %p170 = por %p168, %p169
    %p171 = scmp.ne.s32.totalorder %s160, %s161
    %p172 = scmp.eq.s32.totalorder %s16, 0
    %p173 = por %p171, %p172
    %p174 = scmp.ne.s32.totalorder %s160, %s161
    %p175 = scmp.eq.s32.totalorder %s17, 1
    %p176 = por %p174, %p175
    %p178 = scmp.ne.s32.totalorder %s161, %s177
    %p179 = scmp.eq.s32.totalorder %s17, 0
    %p180 = por %p178, %p179
    %p181 = scmp.le.s32.totalorder 1, %s11
    %p182 = scmp.lt.s32.totalorder %s11, 3
    %p183 = pnand %p181, %p182
    %p184 = pneg %p183
    // Predicated region
    $region9: #{_nlb_forward.4} parent=5 // pred_check
      _
    $region10: #{_nlb_forward.4} parent=5 // pred_check_branch
      %186 = sbr.rel (%p183) target = $region12
    $region11: #{_nlb_forward.4} parent=5 // pred_region
      %s187 = ssub.s32 %s11, 1
      // Predicated region
      $region13: #{_nlb_forward.4} parent=11 // pred_check
        %p188 = pneg %p124
      $region14: #{_nlb_forward.4} parent=11 // pred_check_branch
        %190 = sbr.rel (%p188) target = $region16
      $region15: #{_nlb_forward.4} parent=11 // pred_region
        _
      $region16: #{_nlb_forward.4} parent=11 // pred_fallthru
        _
      // Predicated region
      $region17: #{_nlb_forward.4} parent=11 // pred_check
        %p191 = pneg %p145
      $region18: #{_nlb_forward.4} parent=11 // pred_check_branch
        %193 = sbr.rel (%p191) target = $region20
      $region19: #{_nlb_forward.4} parent=11 // pred_region
        _
      $region20: #{_nlb_forward.4} parent=11 // pred_fallthru
        _
    $region12: #{_nlb_forward.4} parent=5 // pred_fallthru
      _
    %p194 = scmp.lt.s32.totalorder %s11, 2
    // Predicated region
    $region21: #{_nlb_forward.4} parent=5 // pred_check
      %p195 = pneg %p194
    $region22: #{_nlb_forward.4} parent=5 // pred_check_branch
      %197 = sbr.rel (%p195) target = $region24
    $region23: #{_nlb_forward.4} parent=5 // pred_region
      // Predicated region
      $region25: #{_nlb_forward.4} parent=23 // pred_check
        %p198 = pneg %p45
      $region26: #{_nlb_forward.4} parent=23 // pred_check_branch
        %200 = sbr.rel (%p198) target = $region28
      $region27: #{_nlb_forward.4} parent=23 // pred_region
        %p201 = scmp.lt.s32.totalorder %s18, 1
        %s202 = scalar_select %p201, %s18, 1
        %p203 = scmp.lt.s32.totalorder %s19, 0
        %s204 = scalar_select %p203, %s19, 0
        %s205 = sadd.s32 %s204, %s202
        %s206 = scalar_lea.vmem %s0, %s205
      $region28: #{_nlb_forward.4} parent=23 // pred_fallthru
        _
      // Predicated region
      $region29: #{_nlb_forward.4} parent=23 // pred_check
        %p207 = pneg %p71
      $region30: #{_nlb_forward.4} parent=23 // pred_check_branch
        %209 = sbr.rel (%p207) target = $region32
      $region31: #{_nlb_forward.4} parent=23 // pred_region
        %p210 = scmp.lt.s32.totalorder %s18, 1
        %s211 = scalar_select %p210, %s18, 1
        %s212 = smul.addr %s211, 2
        %s213 = scalar_lea.vmem %s1, %s212
      $region32: #{_nlb_forward.4} parent=23 // pred_fallthru
        _
      // Predicated region
      $region33: #{_nlb_forward.4} parent=23 // pred_check
        %p214 = pneg %p97
      $region34: #{_nlb_forward.4} parent=23 // pred_check_branch
        %216 = sbr.rel (%p214) target = $region36
      $region35: #{_nlb_forward.4} parent=23 // pred_region
        %p217 = scmp.lt.s32.totalorder %s18, 1
        %s218 = scalar_select %p217, %s18, 1
        %s219 = smul.addr %s218, 2
        %s220 = scalar_lea.vmem %s2, %s219
      $region36: #{_nlb_forward.4} parent=23 // pred_fallthru
        _
    $region24: #{_nlb_forward.4} parent=5 // pred_fallthru
      _
    %p221 = scmp.le.s32.totalorder 1, %s11
    %p222 = scmp.lt.s32.totalorder %s11, 3
    %p223 = pnand %p221, %p222
    %p224 = pneg %p223
    // Predicated region
    $region37: #{_nlb_forward.4} parent=5 // pred_check
      _
    $region38: #{_nlb_forward.4} parent=5 // pred_check_branch
      %226 = sbr.rel (%p223) target = $region40
    $region39: #{_nlb_forward.4} parent=5 // pred_region
      %s227 = ssub.s32 %s11, 1
      %p228 = scmp.lt.s32.totalorder %s20, 1
      %s229 = scalar_select %p228, %s20, 1
      %p230 = scmp.lt.s32.totalorder %s21, 0
      %s231 = scalar_select %p230, %s21, 0
      %s232 = sadd.s32 %s231, %s229
      %s233 = scalar_lea.vmem %s0, %s232
      %p234 = pneg %p51
      %p235 = pneg %p48
      %p236 = scmp.lt.s32.totalorder %s20, 1
      %s237 = scalar_select %p236, %s20, 1
      %s238 = smul.addr %s237, 2
      %s239 = scalar_lea.vmem %s1, %s238
      %p240 = pneg %p77
      %p241 = pneg %p74
      %p242 = scmp.lt.s32.totalorder %s20, 1
      %s243 = scalar_select %p242, %s20, 1
      %s244 = smul.addr %s243, 2
      %s245 = scalar_lea.vmem %s2, %s244
      %p246 = pneg %p103
      %p247 = pneg %p100
      %p248 = pneg %p124
      %p249 = pneg %p121
      %p250 = pneg %p145
      %p251 = pneg %p142
      %p252 = pneg %p173
      %p253 = pneg %p170
      %p254 = scmp.lt.s32.totalorder %s20, 1
      %s255 = scalar_select %p254, %s20, 1
      %p256 = scmp.lt.s32.totalorder %s21, 0
      %s257 = scalar_select %p256, %s21, 0
      %s258 = sadd.s32 %s257, %s255
      %s259 = smul.addr %s258, 4
      %s260 = scalar_lea.vmem %s5, %s259
      %p261 = scmp.lt.s32.totalorder %s20, 1
      %s262 = scalar_select %p261, %s20, 1
      %p263 = scmp.lt.s32.totalorder %s21, 0
      %s264 = scalar_select %p263, %s21, 0
      %s265 = sadd.s32 %s264, %s262
      %s266 = scalar_lea.vmem %s0, %s265
      %p267 = scmp.lt.s32.totalorder %s20, 1
      %s268 = scalar_select %p267, %s20, 1
      %s269 = smul.addr %s268, 2
      %s270 = scalar_lea.vmem %s1, %s269
      %p271 = scmp.lt.s32.totalorder %s20, 1
      %s272 = scalar_select %p271, %s20, 1
      %s273 = smul.addr %s272, 2
      %s274 = scalar_lea.vmem %s2, %s273
      %p275 = scmp.lt.s32.totalorder %s20, 1
      %s276 = scalar_select %p275, %s20, 1
      %p277 = scmp.lt.s32.totalorder %s21, 0
      %s278 = scalar_select %p277, %s21, 0
      %s279 = sadd.s32 %s278, %s276
      %s280 = smul.addr %s279, 4
      %s281 = scalar_lea.vmem %s5, %s280
      %v283 = vld [vmem:[%s266] sm:$0x1]
      %v284 = vld [vmem:[%s270] sm:$0x3]
      %v285 = vld [vmem:[%s274] sm:$0x3]
      %286 = vxpose.xlu0.c.b16.start [1/8] %v283, 128
      %287 = vxpose.xlu0.c.b16.cont [2/8] 0, 128
      %288 = vxpose.xlu0.c.b16.cont [3/8] 0, 128
      %289 = vxpose.xlu0.c.b16.cont [4/8] 0, 128
      %290 = vxpose.xlu0.c.b16.cont [5/8] 0, 128
      %291 = vxpose.xlu0.c.b16.cont [6/8] 0, 128
      %292 = vxpose.xlu0.c.b16.cont [7/8] 0, 128
      %293 = vxpose.xlu0.c.b16.end [8/8] 0, 128
      %v294 = vpop.trf.xlu0
      %v295 = vpop.trf.xlu0
      %v296 = vpop.trf.xlu0
      %v297 = vpop.trf.xlu0
      %v298 = vpop.trf.xlu0
      %v299 = vpop.trf.xlu0
      %v300 = vpop.trf.xlu0
      %v301 = vpop.trf.xlu0
      %vm302 = vcmask 15360
      %v304 = vsel %vm302, %v294, 0
      %v307 = vsel %vm302, %v284, 0
      %309 = vmatprep.subr.bf16.mxu0 0
      %310 = vmatpush1.bf16.xpose.msra.mxu0 0
      %311 = vmatprep.subr.bf16.mxu0 0
      %312 = vmatpush1.bf16.xpose.msra.mxu0 0
      %313 = vmatprep.subr.bf16.mxu0 0
      %314 = vmatpush1.bf16.xpose.msra.mxu0 0
      %315 = vmatprep.subr.bf16.mxu0 0
      %316 = vmatpush1.bf16.xpose.msra.mxu0 0
      %317 = vmatprep.subr.bf16.mxu0 0
      %318 = vmatpush1.bf16.xpose.msra.mxu0 0
      %319 = vmatprep.subr.bf16.mxu0 0
      %320 = vmatpush1.bf16.xpose.msra.mxu0 0
      %321 = vmatprep.subr.bf16.mxu0 0
      %322 = vmatpush1.bf16.xpose.msra.mxu0 0
      %323 = vmatprep.subr.bf16.mxu0 0
      %324 = vmatpush1.bf16.xpose.msra.mxu0 %v307
      %325 = vmatprep.subr.bf16.mxu0 0
      %326 = vmatpush2.bf16.xpose.msra.mxu0 0
      %327 = vmatprep.subr.bf16.mxu0 0
      %328 = vmatpush2.bf16.xpose.msra.mxu0 0
      %329 = vmatprep.subr.bf16.mxu0 0
      %330 = vmatpush2.bf16.xpose.msra.mxu0 0
      %331 = vmatprep.subr.bf16.mxu0 0
      %332 = vmatpush2.bf16.xpose.msra.mxu0 0
      %333 = vmatprep.subr.bf16.mxu0 0
      %334 = vmatpush2.bf16.xpose.msra.mxu0 0
      %335 = vmatprep.subr.bf16.mxu0 0
      %336 = vmatpush2.bf16.xpose.msra.mxu0 0
      %337 = vmatprep.subr.bf16.mxu0 0
      %338 = vmatpush2.bf16.xpose.msra.mxu0 0
      %339 = vmatprep.subr.bf16.mxu0 0
      %340 = vmatpush2.bf16.xpose.msra.mxu0 0
      %341 = vmatprep.mubr.bf16.mxu0 0
      %342 = vmatmul.mubr.bf16.gmra.mxu0 %v304
      %v343 = vpop.f32.mrf.mxu0
      %v344 = vadd.f32 0.0, %v343
      %v345 = vpop.f32.mrf.mxu0
      %v346 = vpop.f32.mrf.mxu0
      %v347 = vadd.f32 0.0, %v346
      %v348 = vpop.f32.mrf.mxu0
      %349 = vdwg.mxu0
      %vm350 = vcmask 31744
      %v351 = vsel %vm350, %v344, -inf
      %352 = vmax.xlane.f32.xlu0 %v351
      %v353 = vpop.xlane.xlu0 %352
      %v354 = vsel %vm350, %v347, -inf
      %355 = vmax.xlane.f32.xlu0 %v354
      %v356 = vpop.xlane.xlu0 %355
      %v357 = vsub.f32 %v344, %v353
      %v358 = vsub.f32 %v347, %v356
      %v359 = vmul.f32 %v357, 1.442695
      %v360 = vpow.pop %v359
      %v361 = vmul.f32 %v358, 1.442695
      %v362 = vpow.pop %v361
      %v363 = vsel %vm350, %v360, 0.0
      %364 = vadd.xlane.f32.xlu0 %v363
      %v365 = vpop.xlane.xlu0 %364
      %v366 = vsel %vm350, %v362, 0.0
      %367 = vadd.xlane.f32.xlu0 %v366
      %v368 = vpop.xlane.xlu0 %367
      %v369 = vrcp.pop %v365
      %v370 = vrcp.pop %v368
      %v371 = vmul.f32 %v360, %v369
      %v372 = vmul.f32 %v362, %v370
      %v373 = vpack.c.bf16 %v372, %v371
      %v375 = vsel %vm350, %v373, 0
      %vm377 = vcmask 1041408
      %v379 = vsel %vm377, %v285, 0
      %381 = vmatprep.subr.bf16.mxu0 0
      %382 = vmatpush1.bf16.msra.mxu0 0
      %383 = vmatprep.subr.bf16.mxu0 0
      %384 = vmatpush1.bf16.msra.mxu0 0
      %385 = vmatprep.subr.bf16.mxu0 0
      %386 = vmatpush1.bf16.msra.mxu0 0
      %387 = vmatprep.subr.bf16.mxu0 0
      %388 = vmatpush1.bf16.msra.mxu0 0
      %389 = vmatprep.subr.bf16.mxu0 0
      %390 = vmatpush1.bf16.msra.mxu0 0
      %391 = vmatprep.subr.bf16.mxu0 0
      %392 = vmatpush1.bf16.msra.mxu0 0
      %393 = vmatprep.subr.bf16.mxu0 0
      %394 = vmatpush1.bf16.msra.mxu0 0
      %395 = vmatprep.subr.bf16.mxu0 0
      %396 = vmatpush1.bf16.msra.mxu0 %v379
      %397 = vmatprep.subr.bf16.mxu0 0
      %398 = vmatpush2.bf16.msra.mxu0 0
      %399 = vmatprep.subr.bf16.mxu0 0
      %400 = vmatpush2.bf16.msra.mxu0 0
      %401 = vmatprep.subr.bf16.mxu0 0
      %402 = vmatpush2.bf16.msra.mxu0 0
      %403 = vmatprep.subr.bf16.mxu0 0
      %404 = vmatpush2.bf16.msra.mxu0 0
      %405 = vmatprep.subr.bf16.mxu0 0
      %406 = vmatpush2.bf16.msra.mxu0 0
      %407 = vmatprep.subr.bf16.mxu0 0
      %408 = vmatpush2.bf16.msra.mxu0 0
      %409 = vmatprep.subr.bf16.mxu0 0
      %410 = vmatpush2.bf16.msra.mxu0 0
      %411 = vmatprep.subr.bf16.mxu0 0
      %412 = vmatpush2.bf16.msra.mxu0 0
      %413 = vmatprep.mubr.bf16.mxu0 0
      %414 = vmatmul.mubr.bf16.gmra.mxu0 %v375
      %v415 = vpop.f32.mrf.mxu0
      %v416 = vadd.f32 0.0, %v415
      %v417 = vpop.f32.mrf.mxu0
      %v418 = vpop.f32.mrf.mxu0
      %v419 = vadd.f32 0.0, %v418
      %v420 = vpop.f32.mrf.mxu0
      %421 = vdwg.mxu0
      %v422 = vld [vmem:[%s3] sm:$0x3]
      %v423 = vld [vmem:[%s4] sm:$0xf]
      %425 = vset.pattern.permute.xlu0 0
      %426 = vperm.xlu0 %425, %v423
      %v427 = vpop.permute.xlu0 %426
      %429 = vxpose.xlu0.b32.start [1/16] %v422, 128
      %430 = vxpose.xlu0.b32.cont [2/16] 0.0, 128
      %431 = vxpose.xlu0.b32.cont [3/16] 0.0, 128
      %432 = vxpose.xlu0.b32.cont [4/16] 0.0, 128
      %433 = vxpose.xlu0.b32.cont [5/16] 0.0, 128
      %434 = vxpose.xlu0.b32.cont [6/16] 0.0, 128
      %435 = vxpose.xlu0.b32.cont [7/16] 0.0, 128
      %436 = vxpose.xlu0.b32.cont [8/16] 0.0, 128
      %437 = vxpose.xlu0.b32.cont [9/16] 0.0, 128
      %438 = vxpose.xlu0.b32.cont [10/16] 0.0, 128
      %439 = vxpose.xlu0.b32.cont [11/16] 0.0, 128
      %440 = vxpose.xlu0.b32.cont [12/16] 0.0, 128
      %441 = vxpose.xlu0.b32.cont [13/16] 0.0, 128
      %442 = vxpose.xlu0.b32.cont [14/16] 0.0, 128
      %443 = vxpose.xlu0.b32.cont [15/16] 0.0, 128
      %444 = vxpose.xlu0.b32.end [16/16] 0.0, 128
      %v445 = vpop.trf.xlu0
      %v446 = vpop.trf.xlu0
      %v447 = vpop.trf.xlu0
      %v448 = vpop.trf.xlu0
      %v449 = vpop.trf.xlu0
      %v450 = vpop.trf.xlu0
      %v451 = vpop.trf.xlu0
      %v452 = vpop.trf.xlu0
      %v453 = vpop.trf.xlu0
      %v454 = vpop.trf.xlu0
      %v455 = vpop.trf.xlu0
      %v456 = vpop.trf.xlu0
      %v457 = vpop.trf.xlu0
      %v458 = vpop.trf.xlu0
      %v459 = vpop.trf.xlu0
      %v460 = vpop.trf.xlu0
      %v462 = vsel %vm302, %v445, 0
      %v465 = vsel %vm302, %v416, 0
      %v468 = vsel %vm302, %v419, 0
      %470 = vmatprep.subr.mxu0 0.0
      %471 = vmatpush1.xpose.msra.mxu0 0.0
      %472 = vmatprep.subr.mxu0 0.0
      %473 = vmatpush1.xpose.msra.mxu0 0.0
      %474 = vmatprep.subr.mxu0 0.0
      %475 = vmatpush1.xpose.msra.mxu0 0.0
      %476 = vmatprep.subr.mxu0 0.0
      %477 = vmatpush1.xpose.msra.mxu0 0.0
      %478 = vmatprep.subr.mxu0 0.0
      %479 = vmatpush1.xpose.msra.mxu0 0.0
      %480 = vmatprep.subr.mxu0 0.0
      %481 = vmatpush1.xpose.msra.mxu0 0.0
      %482 = vmatprep.subr.mxu0 0.0
      %483 = vmatpush1.xpose.msra.mxu0 0.0
      %484 = vmatprep.subr.mxu0 0.0
      %485 = vmatpush1.xpose.msra.mxu0 0.0
      %486 = vmatprep.subr.mxu0 0.0
      %487 = vmatpush1.xpose.msra.mxu0 0.0
      %488 = vmatprep.subr.mxu0 0.0
      %489 = vmatpush1.xpose.msra.mxu0 0.0
      %490 = vmatprep.subr.mxu0 0.0
      %491 = vmatpush1.xpose.msra.mxu0 0.0
      %492 = vmatprep.subr.mxu0 0.0
      %493 = vmatpush1.xpose.msra.mxu0 0.0
      %494 = vmatprep.subr.mxu0 0.0
      %495 = vmatpush1.xpose.msra.mxu0 0.0
      %496 = vmatprep.subr.mxu0 0.0
      %497 = vmatpush1.xpose.msra.mxu0 0.0
      %498 = vmatprep.subr.mxu0 0.0
      %499 = vmatpush1.xpose.msra.mxu0 %v468
      %500 = vmatprep.subr.mxu0 0.0
      %501 = vmatpush1.xpose.msra.mxu0 %v465
      %502 = vmatprep.subr.mxu0 0.0
      %503 = vmatpush2.xpose.msra.mxu0 0.0
      %504 = vmatprep.subr.mxu0 0.0
      %505 = vmatpush2.xpose.msra.mxu0 0.0
      %506 = vmatprep.subr.mxu0 0.0
      %507 = vmatpush2.xpose.msra.mxu0 0.0
      %508 = vmatprep.subr.mxu0 0.0
      %509 = vmatpush2.xpose.msra.mxu0 0.0
      %510 = vmatprep.subr.mxu0 0.0
      %511 = vmatpush2.xpose.msra.mxu0 0.0
      %512 = vmatprep.subr.mxu0 0.0
      %513 = vmatpush2.xpose.msra.mxu0 0.0
      %514 = vmatprep.subr.mxu0 0.0
      %515 = vmatpush2.xpose.msra.mxu0 0.0
      %516 = vmatprep.subr.mxu0 0.0
      %517 = vmatpush2.xpose.msra.mxu0 0.0
      %518 = vmatprep.subr.mxu0 0.0
      %519 = vmatpush2.xpose.msra.mxu0 0.0
      %520 = vmatprep.subr.mxu0 0.0
      %521 = vmatpush2.xpose.msra.mxu0 0.0
      %522 = vmatprep.subr.mxu0 0.0
      %523 = vmatpush2.xpose.msra.mxu0 0.0
      %524 = vmatprep.subr.mxu0 0.0
      %525 = vmatpush2.xpose.msra.mxu0 0.0
      %526 = vmatprep.subr.mxu0 0.0
      %527 = vmatpush2.xpose.msra.mxu0 0.0
      %528 = vmatprep.subr.mxu0 0.0
      %529 = vmatpush2.xpose.msra.mxu0 0.0
      %530 = vmatprep.subr.mxu0 0.0
      %531 = vmatpush2.xpose.msra.mxu0 0.0
      %532 = vmatprep.subr.mxu0 0.0
      %533 = vmatpush2.xpose.msra.mxu0 0.0
      %534 = vmatprep.mubr.f32.mxu0 0.0
      %535 = vmatmul.mubr.f32.gmra.mxu0 %v462
      %v536 = vpop.f32.mrf.mxu0
      %v537 = vadd.f32 %v427, %v536
      %v538 = vpop.f32.mrf.mxu0
      %539 = vdwg.mxu0
      %vm540 = vcmask 125952
      %541 = vst.msk [vmem:[%s281] sm:$0xf] %vm540, %v537
      %p542 = scmp.lt.s32.totalorder %s20, 1
      %s543 = scalar_select %p542, %s20, 1
      %p544 = scmp.lt.s32.totalorder %s21, 0
      %s545 = scalar_select %p544, %s21, 0
      %s546 = sadd.s32 %s545, %s543
      %s547 = smul.addr %s546, 4
      %s548 = scalar_lea.vmem %s5, %s547
      // Predicated region
      $region41: #{_nlb_forward.4} parent=39 // pred_check
        %p549 = pneg %p170
      $region42: #{_nlb_forward.4} parent=39 // pred_check_branch
        %551 = sbr.rel (%p549) target = $region44
      $region43: #{_nlb_forward.4} parent=39 // pred_region
        _
      $region44: #{_nlb_forward.4} parent=39 // pred_fallthru
        _
    $region40: #{_nlb_forward.4} parent=5 // pred_fallthru
      _
    %p552 = scmp.le.s32.totalorder 2, %s11
    // Predicated region
    $region45: #{_nlb_forward.4} parent=5 // pred_check
      %p553 = pneg %p552
    $region46: #{_nlb_forward.4} parent=5 // pred_check_branch
      %555 = sbr.rel (%p553) target = $region48
    $region47: #{_nlb_forward.4} parent=5 // pred_region
      %s556 = ssub.s32 %s11, 2
      // Predicated region
      $region49: #{_nlb_forward.4} parent=47 // pred_check
        %p557 = pneg %p176
      $region50: #{_nlb_forward.4} parent=47 // pred_check_branch
        %559 = sbr.rel (%p557) target = $region52
      $region51: #{_nlb_forward.4} parent=47 // pred_region
        %p560 = scmp.lt.s32.totalorder %s22, 1
        %s561 = scalar_select %p560, %s22, 1
        %p562 = scmp.lt.s32.totalorder %s23, 0
        %s563 = scalar_select %p562, %s23, 0
        %s564 = sadd.s32 %s563, %s561
        %s565 = smul.addr %s564, 4
        %s566 = scalar_lea.vmem %s5, %s565
      $region52: #{_nlb_forward.4} parent=47 // pred_fallthru
        _
    $region48: #{_nlb_forward.4} parent=5 // pred_fallthru
      _
  $region6: #{_nlb_forward.4} parent=0 // loop_footer
    %s15 = sadd.s32 1, %s11
  $region7: #{_nlb_forward.4} parent=0 // loop_footer_branch
    %10 = sbr.rel target = $region3
  $region8: #{_nlb_forward.4} parent=0 // loop_exit
    _

// kernel: _nlb_forward.3
$region0: #{_nlb_forward.3}
  #allocation0 [shape = 'u32[]', space=smem, size = 0x4, offset = 0x4, fixed_abs, tag = 'smem constant byte address 0x4 - core index']
  #allocation1 [shape = 'u32[144,128]{1,0:T(1,128)}', space=vmem, size = 0x12000, scoped, tag = 'internal scratch']
  %s0 = inlined_call_operand.vmem [shape: f32[2,4,16,16], index: 0, kind: input, shape index: {}]
  %s1 = inlined_call_operand.vmem [shape: f32[16,4], index: 1, kind: input, shape index: {}]
  %s2 = inlined_call_operand.vmem [shape: f32[4,16], index: 2, kind: input, shape index: {}]
  %s3 = inlined_call_operand.vmem [shape: f32[4,6], index: 3, kind: input, shape index: {}]
  %s4 = inlined_call_operand.vmem [shape: f32[6,1], index: 4, kind: input, shape index: {}]
  %s5 = inlined_call_operand.vmem [shape: bf16[2,2,16], index: 5, kind: output, shape index: {0}]
  %s6 = inlined_call_operand.vmem [shape: bf16[2,4,2], index: 6, kind: output, shape index: {1}]
  %s7 = inlined_call_operand.vmem [shape: bf16[2,4,2], index: 7, kind: output, shape index: {2}]
  %8 = xla_tuple %s5, %s6, %s7
  %s9 = sld [smem:[#allocation0]]
  $region69: #{_nlb_forward.3} parent=0
    _
  %s11 = ssub.s32 1, %s9
  %s12 = scalar_select 0, %s11, %s9
  loop: start=0, step=1, limit=4
  $region2: #{_nlb_forward.3} parent=0 // loop_pre_header
    _
  $region3: #{_nlb_forward.3} parent=0 // loop_header
    %s14 = sphi 0, %s18
    %p15 = scmp.ge.s32.totalorder %s14, 4
    %s24 = sphi 0, %s26
    %s27 = sphi 0, %s24
    %s28 = sphi 0, %s27
    %s44 = sphi 0, %s28
    %s48 = sphi 0, %s48
    %s50 = sphi 0, %s48
    %s51 = sphi 0, %s50
    %s65 = sphi 0, %s51
    %s69 = sphi 0, %s69
    %s71 = sphi 0, %s69
    %s72 = sphi 0, %s71
    %s86 = sphi 0, %s72
    %s90 = sphi 0, %s90
    %s92 = sphi 0, %s90
    %s93 = sphi 0, %s92
    %s107 = sphi 0, %s93
    %s111 = sphi 0, %s111
    %s113 = sphi 0, %s111
    %s114 = sphi 0, %s113
    %s128 = sphi 0, %s114
    %s134 = sphi 0, %s136
    %s137 = sphi 0, %s134
    %s138 = sphi 0, %s137
    %s154 = sphi 0, %s138
    %s160 = sphi 0, %s162
    %s163 = sphi 0, %s160
    %s164 = sphi 0, %s163
    %s180 = sphi 0, %s164
    %s186 = sphi 0, %s188
    %s189 = sphi 0, %s186
    %s190 = sphi 0, %s189
    %s206 = sphi 0, %s190
  $region4: #{_nlb_forward.3} parent=0 // loop_header_branch
    %17 = sbr.rel (%p15) target = $region8
  $region5: #{_nlb_forward.3} parent=0 // loop_body
    %s19 = ssub.s32 %s14, 1
    %s20 = ssub.s32 %s14, 2
    %s21 = sadd.s32 %s14, 1
    %s22 = ssub.s32 %s14, %s21
    %p23 = scmp.eq.s32.totalorder %s22, 0
    %s25 = sadd.s32 %s24, 1
    %s26 = scalar_select %p23, %s24, %s25
    %p29 = pneg %p23
    %p30 = scmp.eq.s32.totalorder %s14, 1
    %p31 = por %p29, %p30
    %p32 = scmp.ne.s32.totalorder %s24, %s27
    %p33 = scmp.eq.s32.totalorder %s14, 0
    %p34 = por %p32, %p33
    %p35 = scmp.ne.s32.totalorder %s24, %s27
    %p36 = scmp.eq.s32.totalorder %s19, 1
    %p37 = por %p35, %p36
    %p38 = scmp.ne.s32.totalorder %s27, %s28
    %p39 = scmp.eq.s32.totalorder %s19, 0
    %p40 = por %p38, %p39
    %p41 = scmp.ne.s32.totalorder %s27, %s28
    %p42 = scmp.eq.s32.totalorder %s20, 1
    %p43 = por %p41, %p42
    %p45 = scmp.ne.s32.totalorder %s28, %s44
    %p46 = scmp.eq.s32.totalorder %s20, 0
    %p47 = por %p45, %p46
    %s49 = sadd.s32 %s48, 1
    %p52 = scmp.eq.s32.totalorder %s14, 1
    %p53 = scmp.ne.s32.totalorder %s48, %s50
    %p54 = scmp.eq.s32.totalorder %s14, 0
    %p55 = por %p53, %p54
    %p56 = scmp.ne.s32.totalorder %s48, %s50
    %p57 = scmp.eq.s32.totalorder %s19, 1
    %p58 = por %p56, %p57
    %p59 = scmp.ne.s32.totalorder %s50, %s51
    %p60 = scmp.eq.s32.totalorder %s19, 0
    %p61 = por %p59, %p60
    %p62 = scmp.ne.s32.totalorder %s50, %s51
    %p63 = scmp.eq.s32.totalorder %s20, 1
    %p64 = por %p62, %p63
    %p66 = scmp.ne.s32.totalorder %s51, %s65
    %p67 = scmp.eq.s32.totalorder %s20, 0
    %p68 = por %p66, %p67
    %s70 = sadd.s32 %s69, 1
    %p73 = scmp.eq.s32.totalorder %s14, 1
    %p74 = scmp.ne.s32.totalorder %s69, %s71
    %p75 = scmp.eq.s32.totalorder %s14, 0
    %p76 = por %p74, %p75
    %p77 = scmp.ne.s32.totalorder %s69, %s71
    %p78 = scmp.eq.s32.totalorder %s19, 1
    %p79 = por %p77, %p78
    %p80 = scmp.ne.s32.totalorder %s71, %s72
    %p81 = scmp.eq.s32.totalorder %s19, 0
    %p82 = por %p80, %p81
    %p83 = scmp.ne.s32.totalorder %s71, %s72
    %p84 = scmp.eq.s32.totalorder %s20, 1
    %p85 = por %p83, %p84
    %p87 = scmp.ne.s32.totalorder %s72, %s86
    %p88 = scmp.eq.s32.totalorder %s20, 0
    %p89 = por %p87, %p88
    %s91 = sadd.s32 %s90, 1
    %p94 = scmp.eq.s32.totalorder %s14, 1
    %p95 = scmp.ne.s32.totalorder %s90, %s92
    %p96 = scmp.eq.s32.totalorder %s14, 0
    %p97 = por %p95, %p96
    %p98 = scmp.ne.s32.totalorder %s90, %s92
    %p99 = scmp.eq.s32.totalorder %s19, 1
    %p100 = por %p98, %p99
    %p101 = scmp.ne.s32.totalorder %s92, %s93
    %p102 = scmp.eq.s32.totalorder %s19, 0
    %p103 = por %p101, %p102
    %p104 = scmp.ne.s32.totalorder %s92, %s93
    %p105 = scmp.eq.s32.totalorder %s20, 1
    %p106 = por %p104, %p105
    %p108 = scmp.ne.s32.totalorder %s93, %s107
    %p109 = scmp.eq.s32.totalorder %s20, 0
    %p110 = por %p108, %p109
    %s112 = sadd.s32 %s111, 1
    %p115 = scmp.eq.s32.totalorder %s14, 1
    %p116 = scmp.ne.s32.totalorder %s111, %s113
    %p117 = scmp.eq.s32.totalorder %s14, 0
    %p118 = por %p116, %p117
    %p119 = scmp.ne.s32.totalorder %s111, %s113
    %p120 = scmp.eq.s32.totalorder %s19, 1
    %p121 = por %p119, %p120
    %p122 = scmp.ne.s32.totalorder %s113, %s114
    %p123 = scmp.eq.s32.totalorder %s19, 0
    %p124 = por %p122, %p123
    %p125 = scmp.ne.s32.totalorder %s113, %s114
    %p126 = scmp.eq.s32.totalorder %s20, 1
    %p127 = por %p125, %p126
    %p129 = scmp.ne.s32.totalorder %s114, %s128
    %p130 = scmp.eq.s32.totalorder %s20, 0
    %p131 = por %p129, %p130
    %s132 = ssub.s32 %s14, %s21
    %p133 = scmp.eq.s32.totalorder %s132, 0
    %s135 = sadd.s32 %s134, 1
    %s136 = scalar_select %p133, %s134, %s135
    %p139 = pneg %p133
    %p140 = scmp.eq.s32.totalorder %s14, 1
    %p141 = por %p139, %p140
    %p142 = scmp.ne.s32.totalorder %s134, %s137
    %p143 = scmp.eq.s32.totalorder %s14, 0
    %p144 = por %p142, %p143
    %p145 = scmp.ne.s32.totalorder %s134, %s137
    %p146 = scmp.eq.s32.totalorder %s19, 1
    %p147 = por %p145, %p146
    %p148 = scmp.ne.s32.totalorder %s137, %s138
    %p149 = scmp.eq.s32.totalorder %s19, 0
    %p150 = por %p148, %p149
    %p151 = scmp.ne.s32.totalorder %s137, %s138
    %p152 = scmp.eq.s32.totalorder %s20, 1
    %p153 = por %p151, %p152
    %p155 = scmp.ne.s32.totalorder %s138, %s154
    %p156 = scmp.eq.s32.totalorder %s20, 0
    %p157 = por %p155, %p156
    %s158 = ssub.s32 %s14, %s21
    %p159 = scmp.eq.s32.totalorder %s158, 0
    %s161 = sadd.s32 %s160, 1
    %s162 = scalar_select %p159, %s160, %s161
    %p165 = pneg %p159
    %p166 = scmp.eq.s32.totalorder %s14, 1
    %p167 = por %p165, %p166
    %p168 = scmp.ne.s32.totalorder %s160, %s163
    %p169 = scmp.eq.s32.totalorder %s14, 0
    %p170 = por %p168, %p169
    %p171 = scmp.ne.s32.totalorder %s160, %s163
    %p172 = scmp.eq.s32.totalorder %s19, 1
    %p173 = por %p171, %p172
    %p174 = scmp.ne.s32.totalorder %s163, %s164
    %p175 = scmp.eq.s32.totalorder %s19, 0
    %p176 = por %p174, %p175
    %p177 = scmp.ne.s32.totalorder %s163, %s164
    %p178 = scmp.eq.s32.totalorder %s20, 1
    %p179 = por %p177, %p178
    %p181 = scmp.ne.s32.totalorder %s164, %s180
    %p182 = scmp.eq.s32.totalorder %s20, 0
    %p183 = por %p181, %p182
    %s184 = ssub.s32 %s14, %s21
    %p185 = scmp.eq.s32.totalorder %s184, 0
    %s187 = sadd.s32 %s186, 1
    %s188 = scalar_select %p185, %s186, %s187
    %p191 = pneg %p185
    %p192 = scmp.eq.s32.totalorder %s14, 1
    %p193 = por %p191, %p192
    %p194 = scmp.ne.s32.totalorder %s186, %s189
    %p195 = scmp.eq.s32.totalorder %s14, 0
    %p196 = por %p194, %p195
    %p197 = scmp.ne.s32.totalorder %s186, %s189
    %p198 = scmp.eq.s32.totalorder %s19, 1
    %p199 = por %p197, %p198
    %p200 = scmp.ne.s32.totalorder %s189, %s190
    %p201 = scmp.eq.s32.totalorder %s19, 0
    %p202 = por %p200, %p201
    %p203 = scmp.ne.s32.totalorder %s189, %s190
    %p204 = scmp.eq.s32.totalorder %s20, 1
    %p205 = por %p203, %p204
    %p207 = scmp.ne.s32.totalorder %s190, %s206
    %p208 = scmp.eq.s32.totalorder %s20, 0
    %p209 = por %p207, %p208
    %p210 = scmp.le.s32.totalorder 1, %s14
    %p211 = scmp.lt.s32.totalorder %s14, 3
    %p212 = pnand %p210, %p211
    %p213 = pneg %p212
    // Predicated region
    $region9: #{_nlb_forward.3} parent=5 // pred_check
      _
    $region10: #{_nlb_forward.3} parent=5 // pred_check_branch
      %215 = sbr.rel (%p212) target = $region12
    $region11: #{_nlb_forward.3} parent=5 // pred_region
      %s216 = ssub.s32 %s14, 1
      // Predicated region
      $region13: #{_nlb_forward.3} parent=11 // pred_check
        %p217 = pneg %p61
      $region14: #{_nlb_forward.3} parent=11 // pred_check_branch
        %219 = sbr.rel (%p217) target = $region16
      $region15: #{_nlb_forward.3} parent=11 // pred_region
        _
      $region16: #{_nlb_forward.3} parent=11 // pred_fallthru
        _
      // Predicated region
      $region17: #{_nlb_forward.3} parent=11 // pred_check
        %p220 = pneg %p82
      $region18: #{_nlb_forward.3} parent=11 // pred_check_branch
        %222 = sbr.rel (%p220) target = $region20
      $region19: #{_nlb_forward.3} parent=11 // pred_region
        _
      $region20: #{_nlb_forward.3} parent=11 // pred_fallthru
        _
      // Predicated region
      $region21: #{_nlb_forward.3} parent=11 // pred_check
        %p223 = pneg %p103
      $region22: #{_nlb_forward.3} parent=11 // pred_check_branch
        %225 = sbr.rel (%p223) target = $region24
      $region23: #{_nlb_forward.3} parent=11 // pred_region
        _
      $region24: #{_nlb_forward.3} parent=11 // pred_fallthru
        _
      // Predicated region
      $region25: #{_nlb_forward.3} parent=11 // pred_check
        %p226 = pneg %p124
      $region26: #{_nlb_forward.3} parent=11 // pred_check_branch
        %228 = sbr.rel (%p226) target = $region28
      $region27: #{_nlb_forward.3} parent=11 // pred_region
        _
      $region28: #{_nlb_forward.3} parent=11 // pred_fallthru
        _
    $region12: #{_nlb_forward.3} parent=5 // pred_fallthru
      _
    %p229 = scmp.lt.s32.totalorder %s14, 2
    // Predicated region
    $region29: #{_nlb_forward.3} parent=5 // pred_check
      %p230 = pneg %p229
    $region30: #{_nlb_forward.3} parent=5 // pred_check_branch
      %232 = sbr.rel (%p230) target = $region32
    $region31: #{_nlb_forward.3} parent=5 // pred_region
      // Predicated region
      $region33: #{_nlb_forward.3} parent=31 // pred_check
        %p233 = pneg %p34
      $region34: #{_nlb_forward.3} parent=31 // pred_check_branch
        %235 = sbr.rel (%p233) target = $region36
      $region35: #{_nlb_forward.3} parent=31 // pred_region
        %p236 = scmp.lt.s32.totalorder %s14, 1
        %s237 = scalar_select %p236, %s14, 1
        %s238 = smul.addr %s237, 8
        %s239 = smul.addr %s238, 8
        %s240 = scalar_lea.vmem %s0, %s239
      $region36: #{_nlb_forward.3} parent=31 // pred_fallthru
        _
    $region32: #{_nlb_forward.3} parent=5 // pred_fallthru
      _
    %p241 = scmp.le.s32.totalorder 1, %s14
    %p242 = scmp.lt.s32.totalorder %s14, 3
    %p243 = pnand %p241, %p242
    %p244 = pneg %p243
    // Predicated region
    $region37: #{_nlb_forward.3} parent=5 // pred_check
      _
    $region38: #{_nlb_forward.3} parent=5 // pred_check_branch
      %246 = sbr.rel (%p243) target = $region40
    $region39: #{_nlb_forward.3} parent=5 // pred_region
      %s247 = ssub.s32 %s14, 1
      %p248 = scmp.lt.s32.totalorder %s19, 1
      %s249 = scalar_select %p248, %s19, 1
      %s250 = smul.addr %s249, 8
      %s251 = smul.addr %s250, 8
      %s252 = scalar_lea.vmem %s0, %s251
      %p253 = pneg %p40
      %p254 = pneg %p37
      %p255 = pneg %p61
      %p256 = pneg %p58
      %p257 = pneg %p82
      %p258 = pneg %p79
      %p259 = pneg %p103
      %p260 = pneg %p100
      %p261 = pneg %p124
      %p262 = pneg %p121
      %p263 = pneg %p150
      %p264 = pneg %p147
      %p265 = scmp.lt.s32.totalorder %s19, 1
      %s266 = scalar_select %p265, %s19, 1
      %s267 = scalar_lea.vmem %s5, %s266
      %p268 = pneg %p176
      %p269 = pneg %p173
      %p270 = scmp.lt.s32.totalorder %s19, 1
      %s271 = scalar_select %p270, %s19, 1
      %s272 = smul.addr %s271, 2
      %s273 = scalar_lea.vmem %s6, %s272
      %p274 = pneg %p202
      %p275 = pneg %p199
      %p276 = scmp.lt.s32.totalorder %s19, 1
      %s277 = scalar_select %p276, %s19, 1
      %s278 = smul.addr %s277, 2
      %s279 = scalar_lea.vmem %s7, %s278
      %p280 = scmp.lt.s32.totalorder %s19, 1
      %s281 = scalar_select %p280, %s19, 1
      %s282 = smul.addr %s281, 8
      %s283 = smul.addr %s282, 8
      %s284 = scalar_lea.vmem %s0, %s283
      %p285 = scmp.lt.s32.totalorder %s19, 1
      %s286 = scalar_select %p285, %s19, 1
      %s287 = scalar_lea.vmem %s5, %s286
      %p288 = scmp.lt.s32.totalorder %s19, 1
      %s289 = scalar_select %p288, %s19, 1
      %s290 = smul.addr %s289, 2
      %s291 = scalar_lea.vmem %s6, %s290
      %p292 = scmp.lt.s32.totalorder %s19, 1
      %s293 = scalar_select %p292, %s19, 1
      %s294 = smul.addr %s293, 2
      %s295 = scalar_lea.vmem %s7, %s294
      %v296 = vld [vmem:[%s284] sm:$0xff]
      %v297 = vld [vmem:[%s284 + $0x8] sm:$0xff]
      %v298 = vld [vmem:[%s284 + $0x10] sm:$0xff]
      %v299 = vld [vmem:[%s284 + $0x18] sm:$0xff]
      %v300 = vld [vmem:[%s284 + $0x20] sm:$0xff]
      %v301 = vld [vmem:[%s284 + $0x28] sm:$0xff]
      %v302 = vld [vmem:[%s284 + $0x30] sm:$0xff]
      %v303 = vld [vmem:[%s284 + $0x38] sm:$0xff]
      %v304 = vld [vmem:[%s1] sm:$0xff]
      %v305 = vld [vmem:[%s1 + $0x8] sm:$0xff]
      %vm306 = vcmask 130048
      %v308 = vsel %vm306, %v296, 0
      %v311 = vsel %vm306, %v297, 0
      %v314 = vsel %vm306, %v298, 0
      %v317 = vsel %vm306, %v299, 0
      %v320 = vsel %vm306, %v300, 0
      %v323 = vsel %vm306, %v301, 0
      %v326 = vsel %vm306, %v302, 0
      %v329 = vsel %vm306, %v303, 0
      %331 = vmatprep.subr.mxu0 0.0
      %332 = vmatpush1.msra.mxu0 0.0
      %333 = vmatprep.subr.mxu0 0.0
      %334 = vmatpush1.msra.mxu0 0.0
      %335 = vmatprep.subr.mxu0 0.0
      %336 = vmatpush1.msra.mxu0 0.0
      %337 = vmatprep.subr.mxu0 0.0
      %338 = vmatpush1.msra.mxu0 0.0
      %339 = vmatprep.subr.mxu0 0.0
      %340 = vmatpush1.msra.mxu0 0.0
      %341 = vmatprep.subr.mxu0 0.0
      %342 = vmatpush1.msra.mxu0 0.0
      %343 = vmatprep.subr.mxu0 0.0
      %344 = vmatpush1.msra.mxu0 0.0
      %345 = vmatprep.subr.mxu0 0.0
      %346 = vmatpush1.msra.mxu0 0.0
      %347 = vmatprep.subr.mxu0 0.0
      %348 = vmatpush1.msra.mxu0 0.0
      %349 = vmatprep.subr.mxu0 0.0
      %350 = vmatpush1.msra.mxu0 0.0
      %351 = vmatprep.subr.mxu0 0.0
      %352 = vmatpush1.msra.mxu0 0.0
      %353 = vmatprep.subr.mxu0 0.0
      %354 = vmatpush1.msra.mxu0 0.0
      %355 = vmatprep.subr.mxu0 0.0
      %356 = vmatpush1.msra.mxu0 0.0
      %357 = vmatprep.subr.mxu0 0.0
      %358 = vmatpush1.msra.mxu0 0.0
      %359 = vmatprep.subr.mxu0 0.0
      %360 = vmatpush1.msra.mxu0 %v305
      %361 = vmatprep.subr.mxu0 0.0
      %362 = vmatpush1.msra.mxu0 %v304
      %363 = vmatprep.subr.mxu0 0.0
      %364 = vmatpush2.msra.mxu0 0.0
      %365 = vmatprep.subr.mxu0 0.0
      %366 = vmatpush2.msra.mxu0 0.0
      %367 = vmatprep.subr.mxu0 0.0
      %368 = vmatpush2.msra.mxu0 0.0
      %369 = vmatprep.subr.mxu0 0.0
      %370 = vmatpush2.msra.mxu0 0.0
      %371 = vmatprep.subr.mxu0 0.0
      %372 = vmatpush2.msra.mxu0 0.0
      %373 = vmatprep.subr.mxu0 0.0
      %374 = vmatpush2.msra.mxu0 0.0
      %375 = vmatprep.subr.mxu0 0.0
      %376 = vmatpush2.msra.mxu0 0.0
      %377 = vmatprep.subr.mxu0 0.0
      %378 = vmatpush2.msra.mxu0 0.0
      %379 = vmatprep.subr.mxu0 0.0
      %380 = vmatpush2.msra.mxu0 0.0
      %381 = vmatprep.subr.mxu0 0.0
      %382 = vmatpush2.msra.mxu0 0.0
      %383 = vmatprep.subr.mxu0 0.0
      %384 = vmatpush2.msra.mxu0 0.0
      %385 = vmatprep.subr.mxu0 0.0
      %386 = vmatpush2.msra.mxu0 0.0
      %387 = vmatprep.subr.mxu0 0.0
      %388 = vmatpush2.msra.mxu0 0.0
      %389 = vmatprep.subr.mxu0 0.0
      %390 = vmatpush2.msra.mxu0 0.0
      %391 = vmatprep.subr.mxu0 0.0
      %392 = vmatpush2.msra.mxu0 0.0
      %393 = vmatprep.subr.mxu0 0.0
      %394 = vmatpush2.msra.mxu0 0.0
      %395 = vmatprep.mubr.f32.mxu0 0.0
      %396 = vmatmul.mubr.f32.gmra.mxu0 %v308
      %v397 = vpop.f32.mrf.mxu0
      %v398 = vadd.f32 0.0, %v397
      %v399 = vpop.f32.mrf.mxu0
      %400 = vmatprep.mubr.f32.mxu0 0.0
      %401 = vmatmul.mubr.f32.gmra.mxu0 %v311
      %v402 = vpop.f32.mrf.mxu0
      %v403 = vadd.f32 0.0, %v402
      %v404 = vpop.f32.mrf.mxu0
      %405 = vmatprep.mubr.f32.mxu0 0.0
      %406 = vmatmul.mubr.f32.gmra.mxu0 %v314
      %v407 = vpop.f32.mrf.mxu0
      %v408 = vadd.f32 0.0, %v407
      %v409 = vpop.f32.mrf.mxu0
      %410 = vmatprep.mubr.f32.mxu0 0.0
      %411 = vmatmul.mubr.f32.gmra.mxu0 %v317
      %v412 = vpop.f32.mrf.mxu0
      %v413 = vadd.f32 0.0, %v412
      %v414 = vpop.f32.mrf.mxu0
      %415 = vmatprep.mubr.f32.mxu0 0.0
      %416 = vmatmul.mubr.f32.gmra.mxu0 %v320
      %v417 = vpop.f32.mrf.mxu0
      %v418 = vadd.f32 0.0, %v417
      %v419 = vpop.f32.mrf.mxu0
      %420 = vmatprep.mubr.f32.mxu0 0.0
      %421 = vmatmul.mubr.f32.gmra.mxu0 %v323
      %v422 = vpop.f32.mrf.mxu0
      %v423 = vadd.f32 0.0, %v422
      %v424 = vpop.f32.mrf.mxu0
      %425 = vmatprep.mubr.f32.mxu0 0.0
      %426 = vmatmul.mubr.f32.gmra.mxu0 %v326
      %v427 = vpop.f32.mrf.mxu0
      %v428 = vadd.f32 0.0, %v427
      %v429 = vpop.f32.mrf.mxu0
      %430 = vmatprep.mubr.f32.mxu0 0.0
      %431 = vmatmul.mubr.f32.gmra.mxu0 %v329
      %v432 = vpop.f32.mrf.mxu0
      %v433 = vadd.f32 0.0, %v432
      %v434 = vpop.f32.mrf.mxu0
      %435 = vdwg.mxu0
      %v436 = vld [vmem:[%s2] sm:$0xf]
      %v438 = vsel %vm306, %v436, 0
      %440 = vmatprep.subr.mxu0 0.0
      %441 = vmatpush1.msra.mxu0 0.0
      %442 = vmatprep.subr.mxu0 0.0
      %443 = vmatpush1.msra.mxu0 0.0
      %444 = vmatprep.subr.mxu0 0.0
      %445 = vmatpush1.msra.mxu0 0.0
      %446 = vmatprep.subr.mxu0 0.0
      %447 = vmatpush1.msra.mxu0 0.0
      %448 = vmatprep.subr.mxu0 0.0
      %449 = vmatpush1.msra.mxu0 0.0
      %450 = vmatprep.subr.mxu0 0.0
      %451 = vmatpush1.msra.mxu0 0.0
      %452 = vmatprep.subr.mxu0 0.0
      %453 = vmatpush1.msra.mxu0 0.0
      %454 = vmatprep.subr.mxu0 0.0
      %455 = vmatpush1.msra.mxu0 0.0
      %456 = vmatprep.subr.mxu0 0.0
      %457 = vmatpush1.msra.mxu0 0.0
      %458 = vmatprep.subr.mxu0 0.0
      %459 = vmatpush1.msra.mxu0 0.0
      %460 = vmatprep.subr.mxu0 0.0
      %461 = vmatpush1.msra.mxu0 0.0
      %462 = vmatprep.subr.mxu0 0.0
      %463 = vmatpush1.msra.mxu0 0.0
      %464 = vmatprep.subr.mxu0 0.0
      %465 = vmatpush1.msra.mxu0 0.0
      %466 = vmatprep.subr.mxu0 0.0
      %467 = vmatpush1.msra.mxu0 0.0
      %468 = vmatprep.subr.mxu0 0.0
      %469 = vmatpush1.msra.mxu0 %v403
      %470 = vmatprep.subr.mxu0 0.0
      %471 = vmatpush1.msra.mxu0 %v398
      %472 = vmatprep.subr.mxu0 0.0
      %473 = vmatpush2.msra.mxu0 0.0
      %474 = vmatprep.subr.mxu0 0.0
      %475 = vmatpush2.msra.mxu0 0.0
      %476 = vmatprep.subr.mxu0 0.0
      %477 = vmatpush2.msra.mxu0 0.0
      %478 = vmatprep.subr.mxu0 0.0
      %479 = vmatpush2.msra.mxu0 0.0
      %480 = vmatprep.subr.mxu0 0.0
      %481 = vmatpush2.msra.mxu0 0.0
      %482 = vmatprep.subr.mxu0 0.0
      %483 = vmatpush2.msra.mxu0 0.0
      %484 = vmatprep.subr.mxu0 0.0
      %485 = vmatpush2.msra.mxu0 0.0
      %486 = vmatprep.subr.mxu0 0.0
      %487 = vmatpush2.msra.mxu0 0.0
      %488 = vmatprep.subr.mxu0 0.0
      %489 = vmatpush2.msra.mxu0 0.0
      %490 = vmatprep.subr.mxu0 0.0
      %491 = vmatpush2.msra.mxu0 0.0
      %492 = vmatprep.subr.mxu0 0.0
      %493 = vmatpush2.msra.mxu0 0.0
      %494 = vmatprep.subr.mxu0 0.0
      %495 = vmatpush2.msra.mxu0 0.0
      %496 = vmatprep.subr.mxu0 0.0
      %497 = vmatpush2.msra.mxu0 0.0
      %498 = vmatprep.subr.mxu0 0.0
      %499 = vmatpush2.msra.mxu0 0.0
      %500 = vmatprep.subr.mxu0 0.0
      %501 = vmatpush2.msra.mxu0 0.0
      %502 = vmatprep.subr.mxu0 0.0
      %503 = vmatpush2.msra.mxu0 0.0
      %504 = vmatprep.mubr.f32.mxu0 0.0
      %505 = vmatmul.mubr.f32.gmra.mxu0 %v438
      %v506 = vpop.f32.mrf.mxu0
      %v507 = vadd.f32 0.0, %v506
      %v508 = vpop.f32.mrf.mxu0
      %509 = vdwg.mxu0
      %510 = vmatprep.subr.mxu0 0.0
      %511 = vmatpush1.msra.mxu0 0.0
      %512 = vmatprep.subr.mxu0 0.0
      %513 = vmatpush1.msra.mxu0 0.0
      %514 = vmatprep.subr.mxu0 0.0
      %515 = vmatpush1.msra.mxu0 0.0
      %516 = vmatprep.subr.mxu0 0.0
      %517 = vmatpush1.msra.mxu0 0.0
      %518 = vmatprep.subr.mxu0 0.0
      %519 = vmatpush1.msra.mxu0 0.0
      %520 = vmatprep.subr.mxu0 0.0
      %521 = vmatpush1.msra.mxu0 0.0
      %522 = vmatprep.subr.mxu0 0.0
      %523 = vmatpush1.msra.mxu0 0.0
      %524 = vmatprep.subr.mxu0 0.0
      %525 = vmatpush1.msra.mxu0 0.0
      %526 = vmatprep.subr.mxu0 0.0
      %527 = vmatpush1.msra.mxu0 0.0
      %528 = vmatprep.subr.mxu0 0.0
      %529 = vmatpush1.msra.mxu0 0.0
      %530 = vmatprep.subr.mxu0 0.0
      %531 = vmatpush1.msra.mxu0 0.0
      %532 = vmatprep.subr.mxu0 0.0
      %533 = vmatpush1.msra.mxu0 0.0
      %534 = vmatprep.subr.mxu0 0.0
      %535 = vmatpush1.msra.mxu0 0.0
      %536 = vmatprep.subr.mxu0 0.0
      %537 = vmatpush1.msra.mxu0 0.0
      %538 = vmatprep.subr.mxu0 0.0
      %539 = vmatpush1.msra.mxu0 %v413
      %540 = vmatprep.subr.mxu0 0.0
      %541 = vmatpush1.msra.mxu0 %v408
      %542 = vmatprep.subr.mxu0 0.0
      %543 = vmatpush2.msra.mxu0 0.0
      %544 = vmatprep.subr.mxu0 0.0
      %545 = vmatpush2.msra.mxu0 0.0
      %546 = vmatprep.subr.mxu0 0.0
      %547 = vmatpush2.msra.mxu0 0.0
      %548 = vmatprep.subr.mxu0 0.0
      %549 = vmatpush2.msra.mxu0 0.0
      %550 = vmatprep.subr.mxu0 0.0
      %551 = vmatpush2.msra.mxu0 0.0
      %552 = vmatprep.subr.mxu0 0.0
      %553 = vmatpush2.msra.mxu0 0.0
      %554 = vmatprep.subr.mxu0 0.0
      %555 = vmatpush2.msra.mxu0 0.0
      %556 = vmatprep.subr.mxu0 0.0
      %557 = vmatpush2.msra.mxu0 0.0
      %558 = vmatprep.subr.mxu0 0.0
      %559 = vmatpush2.msra.mxu0 0.0
      %560 = vmatprep.subr.mxu0 0.0
      %561 = vmatpush2.msra.mxu0 0.0
      %562 = vmatprep.subr.mxu0 0.0
      %563 = vmatpush2.msra.mxu0 0.0
      %564 = vmatprep.subr.mxu0 0.0
      %565 = vmatpush2.msra.mxu0 0.0
      %566 = vmatprep.subr.mxu0 0.0
      %567 = vmatpush2.msra.mxu0 0.0
      %568 = vmatprep.subr.mxu0 0.0
      %569 = vmatpush2.msra.mxu0 0.0
      %570 = vmatprep.subr.mxu0 0.0
      %571 = vmatpush2.msra.mxu0 0.0
      %572 = vmatprep.subr.mxu0 0.0
      %573 = vmatpush2.msra.mxu0 0.0
      %574 = vmatprep.mubr.f32.mxu0 0.0
      %575 = vmatmul.mubr.f32.gmra.mxu0 %v438
      %v576 = vpop.f32.mrf.mxu0
      %v577 = vadd.f32 0.0, %v576
      %v578 = vpop.f32.mrf.mxu0
      %579 = vdwg.mxu0
      %580 = vmatprep.subr.mxu0 0.0
      %581 = vmatpush1.msra.mxu0 0.0
      %582 = vmatprep.subr.mxu0 0.0
      %583 = vmatpush1.msra.mxu0 0.0
      %584 = vmatprep.subr.mxu0 0.0
      %585 = vmatpush1.msra.mxu0 0.0
      %586 = vmatprep.subr.mxu0 0.0
      %587 = vmatpush1.msra.mxu0 0.0
      %588 = vmatprep.subr.mxu0 0.0
      %589 = vmatpush1.msra.mxu0 0.0
      %590 = vmatprep.subr.mxu0 0.0
      %591 = vmatpush1.msra.mxu0 0.0
      %592 = vmatprep.subr.mxu0 0.0
      %593 = vmatpush1.msra.mxu0 0.0
      %594 = vmatprep.subr.mxu0 0.0
      %595 = vmatpush1.msra.mxu0 0.0
      %596 = vmatprep.subr.mxu0 0.0
      %597 = vmatpush1.msra.mxu0 0.0
      %598 = vmatprep.subr.mxu0 0.0
      %599 = vmatpush1.msra.mxu0 0.0
      %600 = vmatprep.subr.mxu0 0.0
      %601 = vmatpush1.msra.mxu0 0.0
      %602 = vmatprep.subr.mxu0 0.0
      %603 = vmatpush1.msra.mxu0 0.0
      %604 = vmatprep.subr.mxu0 0.0
      %605 = vmatpush1.msra.mxu0 0.0
      %606 = vmatprep.subr.mxu0 0.0
      %607 = vmatpush1.msra.mxu0 0.0
      %608 = vmatprep.subr.mxu0 0.0
      %609 = vmatpush1.msra.mxu0 %v423
      %610 = vmatprep.subr.mxu0 0.0
      %611 = vmatpush1.msra.mxu0 %v418
      %612 = vmatprep.subr.mxu0 0.0
      %613 = vmatpush2.msra.mxu0 0.0
      %614 = vmatprep.subr.mxu0 0.0
      %615 = vmatpush2.msra.mxu0 0.0
      %616 = vmatprep.subr.mxu0 0.0
      %617 = vmatpush2.msra.mxu0 0.0
      %618 = vmatprep.subr.mxu0 0.0
      %619 = vmatpush2.msra.mxu0 0.0
      %620 = vmatprep.subr.mxu0 0.0
      %621 = vmatpush2.msra.mxu0 0.0
      %622 = vmatprep.subr.mxu0 0.0
      %623 = vmatpush2.msra.mxu0 0.0
      %624 = vmatprep.subr.mxu0 0.0
      %625 = vmatpush2.msra.mxu0 0.0
      %626 = vmatprep.subr.mxu0 0.0
      %627 = vmatpush2.msra.mxu0 0.0
      %628 = vmatprep.subr.mxu0 0.0
      %629 = vmatpush2.msra.mxu0 0.0
      %630 = vmatprep.subr.mxu0 0.0
      %631 = vmatpush2.msra.mxu0 0.0
      %632 = vmatprep.subr.mxu0 0.0
      %633 = vmatpush2.msra.mxu0 0.0
      %634 = vmatprep.subr.mxu0 0.0
      %635 = vmatpush2.msra.mxu0 0.0
      %636 = vmatprep.subr.mxu0 0.0
      %637 = vmatpush2.msra.mxu0 0.0
      %638 = vmatprep.subr.mxu0 0.0
      %639 = vmatpush2.msra.mxu0 0.0
      %640 = vmatprep.subr.mxu0 0.0
      %641 = vmatpush2.msra.mxu0 0.0
      %642 = vmatprep.subr.mxu0 0.0
      %643 = vmatpush2.msra.mxu0 0.0
      %644 = vmatprep.mubr.f32.mxu0 0.0
      %645 = vmatmul.mubr.f32.gmra.mxu0 %v438
      %v646 = vpop.f32.mrf.mxu0
      %v647 = vadd.f32 0.0, %v646
      %v648 = vpop.f32.mrf.mxu0
      %649 = vdwg.mxu0
      %650 = vmatprep.subr.mxu0 0.0
      %651 = vmatpush1.msra.mxu0 0.0
      %652 = vmatprep.subr.mxu0 0.0
      %653 = vmatpush1.msra.mxu0 0.0
      %654 = vmatprep.subr.mxu0 0.0
      %655 = vmatpush1.msra.mxu0 0.0
      %656 = vmatprep.subr.mxu0 0.0
      %657 = vmatpush1.msra.mxu0 0.0
      %658 = vmatprep.subr.mxu0 0.0
      %659 = vmatpush1.msra.mxu0 0.0
      %660 = vmatprep.subr.mxu0 0.0
      %661 = vmatpush1.msra.mxu0 0.0
      %662 = vmatprep.subr.mxu0 0.0
      %663 = vmatpush1.msra.mxu0 0.0
      %664 = vmatprep.subr.mxu0 0.0
      %665 = vmatpush1.msra.mxu0 0.0
      %666 = vmatprep.subr.mxu0 0.0
      %667 = vmatpush1.msra.mxu0 0.0
      %668 = vmatprep.subr.mxu0 0.0
      %669 = vmatpush1.msra.mxu0 0.0
      %670 = vmatprep.subr.mxu0 0.0
      %671 = vmatpush1.msra.mxu0 0.0
      %672 = vmatprep.subr.mxu0 0.0
      %673 = vmatpush1.msra.mxu0 0.0
      %674 = vmatprep.subr.mxu0 0.0
      %675 = vmatpush1.msra.mxu0 0.0
      %676 = vmatprep.subr.mxu0 0.0
      %677 = vmatpush1.msra.mxu0 0.0
      %678 = vmatprep.subr.mxu0 0.0
      %679 = vmatpush1.msra.mxu0 %v433
      %680 = vmatprep.subr.mxu0 0.0
      %681 = vmatpush1.msra.mxu0 %v428
      %682 = vmatprep.subr.mxu0 0.0
      %683 = vmatpush2.msra.mxu0 0.0
      %684 = vmatprep.subr.mxu0 0.0
      %685 = vmatpush2.msra.mxu0 0.0
      %686 = vmatprep.subr.mxu0 0.0
      %687 = vmatpush2.msra.mxu0 0.0
      %688 = vmatprep.subr.mxu0 0.0
      %689 = vmatpush2.msra.mxu0 0.0
      %690 = vmatprep.subr.mxu0 0.0
      %691 = vmatpush2.msra.mxu0 0.0
      %692 = vmatprep.subr.mxu0 0.0
      %693 = vmatpush2.msra.mxu0 0.0
      %694 = vmatprep.subr.mxu0 0.0
      %695 = vmatpush2.msra.mxu0 0.0
      %696 = vmatprep.subr.mxu0 0.0
      %697 = vmatpush2.msra.mxu0 0.0
      %698 = vmatprep.subr.mxu0 0.0
      %699 = vmatpush2.msra.mxu0 0.0
      %700 = vmatprep.subr.mxu0 0.0
      %701 = vmatpush2.msra.mxu0 0.0
      %702 = vmatprep.subr.mxu0 0.0
      %703 = vmatpush2.msra.mxu0 0.0
      %704 = vmatprep.subr.mxu0 0.0
      %705 = vmatpush2.msra.mxu0 0.0
      %706 = vmatprep.subr.mxu0 0.0
      %707 = vmatpush2.msra.mxu0 0.0
      %708 = vmatprep.subr.mxu0 0.0
      %709 = vmatpush2.msra.mxu0 0.0
      %710 = vmatprep.subr.mxu0 0.0
      %711 = vmatpush2.msra.mxu0 0.0
      %712 = vmatprep.subr.mxu0 0.0
      %713 = vmatpush2.msra.mxu0 0.0
      %714 = vmatprep.mubr.f32.mxu0 0.0
      %715 = vmatmul.mubr.f32.gmra.mxu0 %v438
      %v716 = vpop.f32.mrf.mxu0
      %v717 = vadd.f32 0.0, %v716
      %v718 = vpop.f32.mrf.mxu0
      %719 = vdwg.mxu0
      %v720 = vld [vmem:[%s3] sm:$0xf]
      %v721 = vcombine.low %v507, %v647
      %v723 = vunpack.c.l.s4 1983009808
      %v724 = vunpack.c.0.s8 %v723
      %v725 = vlaneseq
      %v726 = vshrl.u32 %v725, 7
      %v727 = vsub.s32 %v724, %v726
      %v728 = vrot.slane %v721, %v727
      %v729 = vcombine.low %v577, %v717
      %v731 = vunpack.c.l.s4 1983009808
      %v732 = vunpack.c.0.s8 %v731
      %v733 = vlaneseq
      %v734 = vshrl.u32 %v733, 7
      %v735 = vsub.s32 %v732, %v734
      %v736 = vrot.slane %v729, %v735
      %v737 = vcombine.low %v728, %v736
      %v738 = vcombine.high %v728, %v736
      %v740 = vunpack.c.l.s4 1934713408
      %v741 = vunpack.c.0.s8 %v740
      %v742 = vlaneseq
      %v743 = vshrl.u32 %v742, 7
      %v744 = vsub.s32 %v741, %v743
      %v745 = vrot.slane %v737, %v744
      %v747 = vunpack.c.l.s4 1934713408
      %v748 = vunpack.c.0.s8 %v747
      %v749 = vlaneseq
      %v750 = vshrl.u32 %v749, 7
      %v751 = vsub.s32 %v748, %v750
      %v752 = vrot.slane %v738, %v751
      %v753 = vcombine.high %v745, 0.0
      %v754 = vcombine.high %v752, 0.0
      %756 = vrot.lane.b32.xlu0 %v753, 4
      %v757 = vpop.permute.xlu0 %756
      %760 = vrot.lane.b32.xlu0 %v752, 8
      %v761 = vpop.permute.xlu0 %760
      %764 = vrot.lane.b32.xlu0 %v754, 12
      %v765 = vpop.permute.xlu0 %764
      %vm767 = vcmask 31744
      %v768 = vsel %vm767, %v745, %v757
      %vm769 = vcmask 64512
      %v770 = vsel %vm769, %v768, %v761
      %vm771 = vcmask 97280
      %v772 = vsel %vm771, %v770, %v765
      %v773 = vld [vmem:[%s4] sm:$0x3f]
      %775 = vset.pattern.permute.xlu0 0
      %776 = vperm.xlu0 %775, %v773
      %v777 = vpop.permute.xlu0 %776
      %779 = vxpose.xlu0.b32.start [1/16] %v720, 128
      %780 = vxpose.xlu0.b32.cont [2/16] 0.0, 128
      %781 = vxpose.xlu0.b32.cont [3/16] 0.0, 128
      %782 = vxpose.xlu0.b32.cont [4/16] 0.0, 128
      %783 = vxpose.xlu0.b32.cont [5/16] 0.0, 128
      %784 = vxpose.xlu0.b32.cont [6/16] 0.0, 128
      %785 = vxpose.xlu0.b32.cont [7/16] 0.0, 128
      %786 = vxpose.xlu0.b32.cont [8/16] 0.0, 128
      %787 = vxpose.xlu0.b32.cont [9/16] 0.0, 128
      %788 = vxpose.xlu0.b32.cont [10/16] 0.0, 128
      %789 = vxpose.xlu0.b32.cont [11/16] 0.0, 128
      %790 = vxpose.xlu0.b32.cont [12/16] 0.0, 128
      %791 = vxpose.xlu0.b32.cont [13/16] 0.0, 128
      %792 = vxpose.xlu0.b32.cont [14/16] 0.0, 128
      %793 = vxpose.xlu0.b32.cont [15/16] 0.0, 128
      %794 = vxpose.xlu0.b32.end [16/16] 0.0, 128
      %v795 = vpop.trf.xlu0
      %v796 = vpop.trf.xlu0
      %v797 = vpop.trf.xlu0
      %v798 = vpop.trf.xlu0
      %v799 = vpop.trf.xlu0
      %v800 = vpop.trf.xlu0
      %v801 = vpop.trf.xlu0
      %v802 = vpop.trf.xlu0
      %v803 = vpop.trf.xlu0
      %v804 = vpop.trf.xlu0
      %v805 = vpop.trf.xlu0
      %v806 = vpop.trf.xlu0
      %v807 = vpop.trf.xlu0
      %v808 = vpop.trf.xlu0
      %v809 = vpop.trf.xlu0
      %v810 = vpop.trf.xlu0
      %v812 = vsel %vm767, %v795, 0
      %vm814 = vcmask 1043456
      %v816 = vsel %vm814, %v772, 0
      %818 = vmatprep.subr.mxu0 0.0
      %819 = vmatpush1.msra.mxu0 0.0
      %820 = vmatprep.subr.mxu0 0.0
      %821 = vmatpush1.msra.mxu0 0.0
      %822 = vmatprep.subr.mxu0 0.0
      %823 = vmatpush1.msra.mxu0 0.0
      %824 = vmatprep.subr.mxu0 0.0
      %825 = vmatpush1.msra.mxu0 0.0
      %826 = vmatprep.subr.mxu0 0.0
      %827 = vmatpush1.msra.mxu0 0.0
      %828 = vmatprep.subr.mxu0 0.0
      %829 = vmatpush1.msra.mxu0 0.0
      %830 = vmatprep.subr.mxu0 0.0
      %831 = vmatpush1.msra.mxu0 0.0
      %832 = vmatprep.subr.mxu0 0.0
      %833 = vmatpush1.msra.mxu0 0.0
      %834 = vmatprep.subr.mxu0 0.0
      %835 = vmatpush1.msra.mxu0 0.0
      %836 = vmatprep.subr.mxu0 0.0
      %837 = vmatpush1.msra.mxu0 0.0
      %838 = vmatprep.subr.mxu0 0.0
      %839 = vmatpush1.msra.mxu0 0.0
      %840 = vmatprep.subr.mxu0 0.0
      %841 = vmatpush1.msra.mxu0 0.0
      %842 = vmatprep.subr.mxu0 0.0
      %843 = vmatpush1.msra.mxu0 0.0
      %844 = vmatprep.subr.mxu0 0.0
      %845 = vmatpush1.msra.mxu0 0.0
      %846 = vmatprep.subr.mxu0 0.0
      %847 = vmatpush1.msra.mxu0 0.0
      %848 = vmatprep.subr.mxu0 0.0
      %849 = vmatpush1.msra.mxu0 %v816
      %850 = vmatprep.subr.mxu0 0.0
      %851 = vmatpush2.msra.mxu0 0.0
      %852 = vmatprep.subr.mxu0 0.0
      %853 = vmatpush2.msra.mxu0 0.0
      %854 = vmatprep.subr.mxu0 0.0
      %855 = vmatpush2.msra.mxu0 0.0
      %856 = vmatprep.subr.mxu0 0.0
      %857 = vmatpush2.msra.mxu0 0.0
      %858 = vmatprep.subr.mxu0 0.0
      %859 = vmatpush2.msra.mxu0 0.0
      %860 = vmatprep.subr.mxu0 0.0
      %861 = vmatpush2.msra.mxu0 0.0
      %862 = vmatprep.subr.mxu0 0.0
      %863 = vmatpush2.msra.mxu0 0.0
      %864 = vmatprep.subr.mxu0 0.0
      %865 = vmatpush2.msra.mxu0 0.0
      %866 = vmatprep.subr.mxu0 0.0
      %867 = vmatpush2.msra.mxu0 0.0
      %868 = vmatprep.subr.mxu0 0.0
      %869 = vmatpush2.msra.mxu0 0.0
      %870 = vmatprep.subr.mxu0 0.0
      %871 = vmatpush2.msra.mxu0 0.0
      %872 = vmatprep.subr.mxu0 0.0
      %873 = vmatpush2.msra.mxu0 0.0
      %874 = vmatprep.subr.mxu0 0.0
      %875 = vmatpush2.msra.mxu0 0.0
      %876 = vmatprep.subr.mxu0 0.0
      %877 = vmatpush2.msra.mxu0 0.0
      %878 = vmatprep.subr.mxu0 0.0
      %879 = vmatpush2.msra.mxu0 0.0
      %880 = vmatprep.subr.mxu0 0.0
      %881 = vmatpush2.msra.mxu0 0.0
      %882 = vmatprep.mubr.f32.mxu0 0.0
      %883 = vmatmul.mubr.f32.gmra.mxu0 %v812
      %v884 = vpop.f32.mrf.mxu0
      %v885 = vadd.f32 %v777, %v884
      %v886 = vpop.f32.mrf.mxu0
      %887 = vdwg.mxu0
      %v888 = vpack.c.bf16 %v885, %v885
      %vm889 = vcmask 122880
      %890 = vst.msk [vmem:[%s287] sm:$0x1] %vm889, %v888
      %v892 = vrot.slane %v885, 2
      %894 = vxpose.xlu0.b32.start [1/16] %v892, 128
      %895 = vxpose.xlu0.b32.cont [2/16] 0.0, 128
      %896 = vxpose.xlu0.b32.cont [3/16] 0.0, 128
      %897 = vxpose.xlu0.b32.cont [4/16] 0.0, 128
      %898 = vxpose.xlu0.b32.cont [5/16] 0.0, 128
      %899 = vxpose.xlu0.b32.cont [6/16] 0.0, 128
      %900 = vxpose.xlu0.b32.cont [7/16] 0.0, 128
      %901 = vxpose.xlu0.b32.cont [8/16] 0.0, 128
      %902 = vxpose.xlu0.b32.cont [9/16] 0.0, 128
      %903 = vxpose.xlu0.b32.cont [10/16] 0.0, 128
      %904 = vxpose.xlu0.b32.cont [11/16] 0.0, 128
      %905 = vxpose.xlu0.b32.cont [12/16] 0.0, 128
      %906 = vxpose.xlu0.b32.cont [13/16] 0.0, 128
      %907 = vxpose.xlu0.b32.cont [14/16] 0.0, 128
      %908 = vxpose.xlu0.b32.cont [15/16] 0.0, 128
      %909 = vxpose.xlu0.b32.end [16/16] 0.0, 128
      %v910 = vpop.trf.xlu0
      %v911 = vpop.trf.xlu0
      %v912 = vpop.trf.xlu0
      %v913 = vpop.trf.xlu0
      %v914 = vpop.trf.xlu0
      %v915 = vpop.trf.xlu0
      %v916 = vpop.trf.xlu0
      %v917 = vpop.trf.xlu0
      %v918 = vpop.trf.xlu0
      %v919 = vpop.trf.xlu0
      %v920 = vpop.trf.xlu0
      %v921 = vpop.trf.xlu0
      %v922 = vpop.trf.xlu0
      %v923 = vpop.trf.xlu0
      %v924 = vpop.trf.xlu0
      %v925 = vpop.trf.xlu0
      %v928 = vcombine.high %v910, %v910
      %v929 = vcombine.high %v911, %v911
      %vm932 = vcmask 11264
      %v933 = vsel %vm932, %v910, -inf
      %v934 = vsel %vm932, %v928, -inf
      %v935 = vmax.f32 %v933, %v934
      %v936 = vsel %vm932, %v911, -inf
      %v937 = vsel %vm932, %v929, -inf
      %v938 = vmax.f32 %v936, %v937
      %v942 = vunpack.c.l.s4 1983009808
      %v943 = vunpack.c.0.s8 %v942
      %v944 = vlaneseq
      %v945 = vshrl.u32 %v944, 7
      %v946 = vsub.s32 %v943, %v945
      %v947 = vrot.slane %v935, %v946
      %v948 = vcombine.high %v947, %v947
      %v950 = vunpack.c.l.s4 1983009808
      %v951 = vunpack.c.0.s8 %v950
      %v952 = vlaneseq
      %v953 = vshrl.u32 %v952, 7
      %v954 = vsub.s32 %v951, %v953
      %v955 = vrot.slane %v938, %v954
      %v956 = vcombine.high %v955, %v955
      %vm961 = vcmask 9216
      %v962 = vsel %vm961, %v947, -inf
      %v963 = vrot.slane %v962, 4
      %v964 = vmax.f32 %v962, %v963
      %v965 = vrot.slane %v964, 2
      %v966 = vmax.f32 %v964, %v965
      %v967 = vrot.slane %v966, 1
      %v968 = vmax.f32 %v966, %v967
      %v969 = vsel %vm961, %v948, -inf
      %v970 = vrot.slane %v969, 4
      %v971 = vmax.f32 %v969, %v970
      %v972 = vrot.slane %v971, 2
      %v973 = vmax.f32 %v971, %v972
      %v974 = vrot.slane %v973, 1
      %v975 = vmax.f32 %v973, %v974
      %v976 = vsel %vm961, %v955, -inf
      %v977 = vrot.slane %v976, 4
      %v978 = vmax.f32 %v976, %v977
      %v979 = vrot.slane %v978, 2
      %v980 = vmax.f32 %v978, %v979
      %v981 = vrot.slane %v980, 1
      %v982 = vmax.f32 %v980, %v981
      %v983 = vsel %vm961, %v956, -inf
      %v984 = vrot.slane %v983, 4
      %v985 = vmax.f32 %v983, %v984
      %v986 = vrot.slane %v985, 2
      %v987 = vmax.f32 %v985, %v986
      %v988 = vrot.slane %v987, 1
      %v989 = vmax.f32 %v987, %v988
      %v990 = vpack.c.bf16 %v968, %v968
      %v991 = vpack.c.bf16 %v975, %v975
      %v992 = vpack.c.bf16 %v982, %v982
      %v993 = vpack.c.bf16 %v989, %v989
      %v999 = vunpack.c.l.s4 1983009808
      %v1000 = vunpack.c.0.s8 %v999
      %v1001 = vlaneseq
      %v1002 = vshrl.u32 %v1001, 7
      %v1003 = vsub.s32 %v1000, %v1002
      %v1004 = vrot.slane %v990, %v1003
      %v1006 = vunpack.c.l.s4 1983009808
      %v1007 = vunpack.c.0.s8 %v1006
      %v1008 = vlaneseq
      %v1009 = vshrl.u32 %v1008, 7
      %v1010 = vsub.s32 %v1007, %v1009
      %v1011 = vrot.slane %v991, %v1010
      %v1013 = vunpack.c.l.s4 1983009808
      %v1014 = vunpack.c.0.s8 %v1013
      %v1015 = vlaneseq
      %v1016 = vshrl.u32 %v1015, 7
      %v1017 = vsub.s32 %v1014, %v1016
      %v1018 = vrot.slane %v992, %v1017
      %v1020 = vunpack.c.l.s4 1983009808
      %v1021 = vunpack.c.0.s8 %v1020
      %v1022 = vlaneseq
      %v1023 = vshrl.u32 %v1022, 7
      %v1024 = vsub.s32 %v1021, %v1023
      %v1025 = vrot.slane %v993, %v1024
      %v1027 = vunpack.c.l.s4 1983009808
      %v1028 = vunpack.c.0.s8 %v1027
      %v1029 = vlaneseq
      %v1030 = vshrl.u32 %v1029, 7
      %v1031 = vsub.s32 %v1028, %v1030
      %v1032 = vrot.slane %v1004, %v1031
      %v1034 = vunpack.c.l.s4 1983009808
      %v1035 = vunpack.c.0.s8 %v1034
      %v1036 = vlaneseq
      %v1037 = vshrl.u32 %v1036, 7
      %v1038 = vsub.s32 %v1035, %v1037
      %v1039 = vrot.slane %v1011, %v1038
      %v1041 = vunpack.c.l.s4 1983009808
      %v1042 = vunpack.c.0.s8 %v1041
      %v1043 = vlaneseq
      %v1044 = vshrl.u32 %v1043, 7
      %v1045 = vsub.s32 %v1042, %v1044
      %v1046 = vrot.slane %v1018, %v1045
      %v1048 = vunpack.c.l.s4 1983009808
      %v1049 = vunpack.c.0.s8 %v1048
      %v1050 = vlaneseq
      %v1051 = vshrl.u32 %v1050, 7
      %v1052 = vsub.s32 %v1049, %v1051
      %v1053 = vrot.slane %v1025, %v1052
      %v1054 = vunpack.c.l.b16 %v1032
      %v1055 = vunpack.c.l.b16 %v1039
      %v1056 = vunpack.c.l.b16 %v1046
      %v1057 = vunpack.c.l.b16 %v1053
      %v1058 = vrot.slane %v1055, 7
      %vm1059 = vcmask 1041409
      %v1060 = vsel %vm1059, %v1058, %v1054
      %v1061 = vrot.slane %v1056, 6
      %vm1062 = vcmask 1042434
      %v1063 = vsel %vm1062, %v1061, %v1060
      %v1064 = vrot.slane %v1057, 5
      %vm1065 = vcmask 1043459
      %v1066 = vsel %vm1065, %v1064, %v1063
      %v1067 = vpack.c.b16 %v1066, %v1066
      %v1069 = vunpack.c.l.s4 1983009808
      %v1070 = vunpack.c.0.s8 %v1069
      %v1071 = vlaneseq
      %v1072 = vshrl.u32 %v1071, 7
      %v1073 = vsub.s32 %v1070, %v1072
      %v1074 = vrot.slane %v1067, %v1073
      %1076 = vst.msk [vmem:[%s291] sm:$0x3] %vm961, %v1074
      %v1077 = vrot.slane %v885, 4
      %1079 = vxpose.xlu0.b32.start [1/16] %v1077, 128
      %1080 = vxpose.xlu0.b32.cont [2/16] 0.0, 128
      %1081 = vxpose.xlu0.b32.cont [3/16] 0.0, 128
      %1082 = vxpose.xlu0.b32.cont [4/16] 0.0, 128
      %1083 = vxpose.xlu0.b32.cont [5/16] 0.0, 128
      %1084 = vxpose.xlu0.b32.cont [6/16] 0.0, 128
      %1085 = vxpose.xlu0.b32.cont [7/16] 0.0, 128
      %1086 = vxpose.xlu0.b32.cont [8/16] 0.0, 128
      %1087 = vxpose.xlu0.b32.cont [9/16] 0.0, 128
      %1088 = vxpose.xlu0.b32.cont [10/16] 0.0, 128
      %1089 = vxpose.xlu0.b32.cont [11/16] 0.0, 128
      %1090 = vxpose.xlu0.b32.cont [12/16] 0.0, 128
      %1091 = vxpose.xlu0.b32.cont [13/16] 0.0, 128
      %1092 = vxpose.xlu0.b32.cont [14/16] 0.0, 128
      %1093 = vxpose.xlu0.b32.cont [15/16] 0.0, 128
      %1094 = vxpose.xlu0.b32.end [16/16] 0.0, 128
      %v1095 = vpop.trf.xlu0
      %v1096 = vpop.trf.xlu0
      %v1097 = vpop.trf.xlu0
      %v1098 = vpop.trf.xlu0
      %v1099 = vpop.trf.xlu0
      %v1100 = vpop.trf.xlu0
      %v1101 = vpop.trf.xlu0
      %v1102 = vpop.trf.xlu0
      %v1103 = vpop.trf.xlu0
      %v1104 = vpop.trf.xlu0
      %v1105 = vpop.trf.xlu0
      %v1106 = vpop.trf.xlu0
      %v1107 = vpop.trf.xlu0
      %v1108 = vpop.trf.xlu0
      %v1109 = vpop.trf.xlu0
      %v1110 = vpop.trf.xlu0
      %v1113 = vcombine.high %v1095, %v1095
      %v1114 = vcombine.high %v1096, %v1096
      %v1117 = vsel %vm932, %v1095, -inf
      %v1118 = vsel %vm932, %v1113, -inf
      %v1119 = vmax.f32 %v1117, %v1118
      %v1120 = vsel %vm932, %v1096, -inf
      %v1121 = vsel %vm932, %v1114, -inf
      %v1122 = vmax.f32 %v1120, %v1121
      %v1126 = vunpack.c.l.s4 1983009808
      %v1127 = vunpack.c.0.s8 %v1126
      %v1128 = vlaneseq
      %v1129 = vshrl.u32 %v1128, 7
      %v1130 = vsub.s32 %v1127, %v1129
      %v1131 = vrot.slane %v1119, %v1130
      %v1132 = vcombine.high %v1131, %v1131
      %v1134 = vunpack.c.l.s4 1983009808
      %v1135 = vunpack.c.0.s8 %v1134
      %v1136 = vlaneseq
      %v1137 = vshrl.u32 %v1136, 7
      %v1138 = vsub.s32 %v1135, %v1137
      %v1139 = vrot.slane %v1122, %v1138
      %v1140 = vcombine.high %v1139, %v1139
      %v1145 = vsel %vm961, %v1131, -inf
      %v1146 = vrot.slane %v1145, 4
      %v1147 = vmax.f32 %v1145, %v1146
      %v1148 = vrot.slane %v1147, 2
      %v1149 = vmax.f32 %v1147, %v1148
      %v1150 = vrot.slane %v1149, 1
      %v1151 = vmax.f32 %v1149, %v1150
      %v1152 = vsel %vm961, %v1132, -inf
      %v1153 = vrot.slane %v1152, 4
      %v1154 = vmax.f32 %v1152, %v1153
      %v1155 = vrot.slane %v1154, 2
      %v1156 = vmax.f32 %v1154, %v1155
      %v1157 = vrot.slane %v1156, 1
      %v1158 = vmax.f32 %v1156, %v1157
      %v1159 = vsel %vm961, %v1139, -inf
      %v1160 = vrot.slane %v1159, 4
      %v1161 = vmax.f32 %v1159, %v1160
      %v1162 = vrot.slane %v1161, 2
      %v1163 = vmax.f32 %v1161, %v1162
      %v1164 = vrot.slane %v1163, 1
      %v1165 = vmax.f32 %v1163, %v1164
      %v1166 = vsel %vm961, %v1140, -inf
      %v1167 = vrot.slane %v1166, 4
      %v1168 = vmax.f32 %v1166, %v1167
      %v1169 = vrot.slane %v1168, 2
      %v1170 = vmax.f32 %v1168, %v1169
      %v1171 = vrot.slane %v1170, 1
      %v1172 = vmax.f32 %v1170, %v1171
      %v1173 = vpack.c.bf16 %v1151, %v1151
      %v1174 = vpack.c.bf16 %v1158, %v1158
      %v1175 = vpack.c.bf16 %v1165, %v1165
      %v1176 = vpack.c.bf16 %v1172, %v1172
      %v1182 = vunpack.c.l.s4 1983009808
      %v1183 = vunpack.c.0.s8 %v1182
      %v1184 = vlaneseq
      %v1185 = vshrl.u32 %v1184, 7
      %v1186 = vsub.s32 %v1183, %v1185
      %v1187 = vrot.slane %v1173, %v1186
      %v1189 = vunpack.c.l.s4 1983009808
      %v1190 = vunpack.c.0.s8 %v1189
      %v1191 = vlaneseq
      %v1192 = vshrl.u32 %v1191, 7
      %v1193 = vsub.s32 %v1190, %v1192
      %v1194 = vrot.slane %v1174, %v1193
      %v1196 = vunpack.c.l.s4 1983009808
      %v1197 = vunpack.c.0.s8 %v1196
      %v1198 = vlaneseq
      %v1199 = vshrl.u32 %v1198, 7
      %v1200 = vsub.s32 %v1197, %v1199
      %v1201 = vrot.slane %v1175, %v1200
      %v1203 = vunpack.c.l.s4 1983009808
      %v1204 = vunpack.c.0.s8 %v1203
      %v1205 = vlaneseq
      %v1206 = vshrl.u32 %v1205, 7
      %v1207 = vsub.s32 %v1204, %v1206
      %v1208 = vrot.slane %v1176, %v1207
      %v1210 = vunpack.c.l.s4 1983009808
      %v1211 = vunpack.c.0.s8 %v1210
      %v1212 = vlaneseq
      %v1213 = vshrl.u32 %v1212, 7
      %v1214 = vsub.s32 %v1211, %v1213
      %v1215 = vrot.slane %v1187, %v1214
      %v1217 = vunpack.c.l.s4 1983009808
      %v1218 = vunpack.c.0.s8 %v1217
      %v1219 = vlaneseq
      %v1220 = vshrl.u32 %v1219, 7
      %v1221 = vsub.s32 %v1218, %v1220
      %v1222 = vrot.slane %v1194, %v1221
      %v1224 = vunpack.c.l.s4 1983009808
      %v1225 = vunpack.c.0.s8 %v1224
      %v1226 = vlaneseq
      %v1227 = vshrl.u32 %v1226, 7
      %v1228 = vsub.s32 %v1225, %v1227
      %v1229 = vrot.slane %v1201, %v1228
      %v1231 = vunpack.c.l.s4 1983009808
      %v1232 = vunpack.c.0.s8 %v1231
      %v1233 = vlaneseq
      %v1234 = vshrl.u32 %v1233, 7
      %v1235 = vsub.s32 %v1232, %v1234
      %v1236 = vrot.slane %v1208, %v1235
      %v1237 = vunpack.c.l.b16 %v1215
      %v1238 = vunpack.c.l.b16 %v1222
      %v1239 = vunpack.c.l.b16 %v1229
      %v1240 = vunpack.c.l.b16 %v1236
      %v1241 = vrot.slane %v1238, 7
      %v1242 = vsel %vm1059, %v1241, %v1237
      %v1243 = vrot.slane %v1239, 6
      %v1244 = vsel %vm1062, %v1243, %v1242
      %v1245 = vrot.slane %v1240, 5
      %v1246 = vsel %vm1065, %v1245, %v1244
      %v1247 = vpack.c.b16 %v1246, %v1246
      %v1249 = vunpack.c.l.s4 1983009808
      %v1250 = vunpack.c.0.s8 %v1249
      %v1251 = vlaneseq
      %v1252 = vshrl.u32 %v1251, 7
      %v1253 = vsub.s32 %v1250, %v1252
      %v1254 = vrot.slane %v1247, %v1253
      %1256 = vst.msk [vmem:[%s295] sm:$0x3] %vm961, %v1254
      %p1257 = scmp.lt.s32.totalorder %s19, 1
      %s1258 = scalar_select %p1257, %s19, 1
      %s1259 = scalar_lea.vmem %s5, %s1258
      %p1260 = scmp.lt.s32.totalorder %s19, 1
      %s1261 = scalar_select %p1260, %s19, 1
      %s1262 = smul.addr %s1261, 2
      %s1263 = scalar_lea.vmem %s6, %s1262
      %p1264 = scmp.lt.s32.totalorder %s19, 1
      %s1265 = scalar_select %p1264, %s19, 1
      %s1266 = smul.addr %s1265, 2
      %s1267 = scalar_lea.vmem %s7, %s1266
      // Predicated region
      $region41: #{_nlb_forward.3} parent=39 // pred_check
        %p1268 = pneg %p147
      $region42: #{_nlb_forward.3} parent=39 // pred_check_branch
        %1270 = sbr.rel (%p1268) target = $region44
      $region43: #{_nlb_forward.3} parent=39 // pred_region
        _
      $region44: #{_nlb_forward.3} parent=39 // pred_fallthru
        _
      // Predicated region
      $region45: #{_nlb_forward.3} parent=39 // pred_check
        %p1271 = pneg %p173
      $region46: #{_nlb_forward.3} parent=39 // pred_check_branch
        %1273 = sbr.rel (%p1271) target = $region48
      $region47: #{_nlb_forward.3} parent=39 // pred_region
        _
      $region48: #{_nlb_forward.3} parent=39 // pred_fallthru
        _
      // Predicated region
      $region49: #{_nlb_forward.3} parent=39 // pred_check
        %p1274 = pneg %p199
      $region50: #{_nlb_forward.3} parent=39 // pred_check_branch
        %1276 = sbr.rel (%p1274) target = $region52
      $region51: #{_nlb_forward.3} parent=39 // pred_region
        _
      $region52: #{_nlb_forward.3} parent=39 // pred_fallthru
        _
    $region40: #{_nlb_forward.3} parent=5 // pred_fallthru
      _
    %p1277 = scmp.le.s32.totalorder 2, %s14
    // Predicated region
    $region53: #{_nlb_forward.3} parent=5 // pred_check
      %p1278 = pneg %p1277
    $region54: #{_nlb_forward.3} parent=5 // pred_check_branch
      %1280 = sbr.rel (%p1278) target = $region56
    $region55: #{_nlb_forward.3} parent=5 // pred_region
      %s1281 = ssub.s32 %s14, 2
      // Predicated region
      $region57: #{_nlb_forward.3} parent=55 // pred_check
        %p1282 = pneg %p153
      $region58: #{_nlb_forward.3} parent=55 // pred_check_branch
        %1284 = sbr.rel (%p1282) target = $region60
      $region59: #{_nlb_forward.3} parent=55 // pred_region
        %p1285 = scmp.lt.s32.totalorder %s20, 1
        %s1286 = scalar_select %p1285, %s20, 1
        %s1287 = scalar_lea.vmem %s5, %s1286
      $region60: #{_nlb_forward.3} parent=55 // pred_fallthru
        _
      // Predicated region
      $region61: #{_nlb_forward.3} parent=55 // pred_check
        %p1288 = pneg %p179
      $region62: #{_nlb_forward.3} parent=55 // pred_check_branch
        %1290 = sbr.rel (%p1288) target = $region64
      $region63: #{_nlb_forward.3} parent=55 // pred_region
        %p1291 = scmp.lt.s32.totalorder %s20, 1
        %s1292 = scalar_select %p1291, %s20, 1
        %s1293 = smul.addr %s1292, 2
        %s1294 = scalar_lea.vmem %s6, %s1293
      $region64: #{_nlb_forward.3} parent=55 // pred_fallthru
        _
      // Predicated region
      $region65: #{_nlb_forward.3} parent=55 // pred_check
        %p1295 = pneg %p205
      $region66: #{_nlb_forward.3} parent=55 // pred_check_branch
        %1297 = sbr.rel (%p1295) target = $region68
      $region67: #{_nlb_forward.3} parent=55 // pred_region
        %p1298 = scmp.lt.s32.totalorder %s20, 1
        %s1299 = scalar_select %p1298, %s20, 1
        %s1300 = smul.addr %s1299, 2
        %s1301 = scalar_lea.vmem %s7, %s1300
      $region68: #{_nlb_forward.3} parent=55 // pred_fallthru
        _
    $region56: #{_nlb_forward.3} parent=5 // pred_fallthru
      _
  $region6: #{_nlb_forward.3} parent=0 // loop_footer
    %s18 = sadd.s32 1, %s14
  $region7: #{_nlb_forward.3} parent=0 // loop_footer_branch
    %13 = sbr.rel target = $region3
  $region8: #{_nlb_forward.3} parent=0 // loop_exit
    _

</llo_original>
